<compile_context>
chip_gen: v6e
topology: v6e:2x2x1
jax: 0.10.0
libtpu: 0.0.40
codegen_flags: <defaults>
</compile_context>

<pallas_src>
import numpy as np
import jax
import jax.numpy as jnp
from jax.experimental import pallas as pl
from jax.experimental.pallas import tpu as pltpu


# PyTorch gate order (i, f, g, o) -> kernel stripe order (i, f, o, g) so the
# three sigmoid gates are contiguous lanes [0 : 3*Hp] (3 vregs, one exp+vrcp
# slab per step).
_GATE_ORDER = (0, 1, 3, 2)


def _round_up(n, m):
    return ((n + m - 1) // m) * m


def _lstm_kernel(x_ref, wih_ref, whh_ref, b_ref, wlin_ref, blin_ref, out_ref):
    # x_ref:    (T*B, I)    time-major, flattened over (t, b); f32 (I==1) / bf16
    # wih_ref:  (I, 4*Hp)   W_ih^T, gate stripes [i|f|o|g], lane-padded
    # whh_ref:  (Hp, 4*Hp)  W_hh^T, bf16, rows H..Hp and pad lanes are zero
    # b_ref:    (1, 4*Hp)   bias_ih + bias_hh, f32, pad lanes zero
    # wlin_ref: (Hp, Op)    linear.weight^T, bf16, zero-padded
    # blin_ref: (1, Op)     f32
    # out_ref:  (B, Op)     lane-dense padded output, f32
    B = out_ref.shape[0]
    Hp = whh_ref.shape[0]
    I = x_ref.shape[1]
    T = x_ref.shape[0] // B
    f32 = jnp.float32

    # ---- Hoisted input projection + bias for ALL T timesteps (lives in vregs,
    # 4 vregs at this size; no VMEM scratch round-trip). ----
    if I == 1:
        # K=1 contraction == outer product -> pure VPU broadcast multiply.
        gx = x_ref[...] * wih_ref[...] + b_ref[...]          # (T*B, 4*Hp) f32
    else:
        gx = (jnp.dot(x_ref[...], wih_ref[...], preferred_element_type=f32)
              + b_ref[...])

    h = jnp.zeros((B, Hp), f32)
    c = jnp.zeros((B, Hp), f32)

    # Fully-unrolled static recurrence: t is a Python int, so the gx row slice
    # is static and W_hh is consumed by the dot in-place each step (no forced
    # cross-step live range).
    for t in range(T):
        gates = (
            jnp.dot(h.astype(whh_ref.dtype), whh_ref[...],
                    preferred_element_type=f32)
            + gx[t * B:(t + 1) * B, :]
        )  # (B, 4*Hp) f32, stripes lane-aligned as [i | f | o | g]

        # Hand-lowered sigmoid for the three gate stripes: exp on the EUP, then
        # approximate reciprocal (vrcp) instead of an exact divide.
        sig = pl.reciprocal(1.0 + jnp.exp(-gates[:, 0:3 * Hp]), approx=True)
        i_g = sig[:, 0:Hp]
        f_g = sig[:, Hp:2 * Hp]
        o_g = sig[:, 2 * Hp:3 * Hp]
        g_g = jnp.tanh(gates[:, 3 * Hp:4 * Hp])

        c = f_g * c + i_g * g_g
        h = o_g * jnp.tanh(c)

    # Final Linear head on the lane-dense padded output (unmasked store).
    out_ref[...] = (
        jnp.dot(h.astype(wlin_ref.dtype), wlin_ref[...],
                preferred_element_type=f32)
        + blin_ref[...]
    )


def lstm_forward(x_btd, w_ih, w_hh, b_ih, b_hh, w_lin, b_lin):
    """x_btd: (B, T, I) float32 (PyTorch batch_first layout)."""
    B, T, I = x_btd.shape
    H = w_hh.shape[1]
    O = w_lin.shape[0]
    Hp = _round_up(H, 128)
    Op = _round_up(O, 128)
    f32 = jnp.float32
    bf16 = jnp.bfloat16

    # Time-major, flattened over (t, b) so row t*B+b is timestep t, batch b.
    x2d = jnp.transpose(x_btd, (1, 0, 2)).reshape(T * B, I).astype(f32)

    wih_t = jnp.transpose(w_ih).astype(f32)   # (I, 4H)
    whh_t = jnp.transpose(w_hh).astype(f32)   # (H, 4H)
    bias = (b_ih + b_hh).astype(f32)          # (4H,)

    def pack_gate_cols(wt, rows):
        # wt: (r, 4H) -> (rows, 4*Hp) with each gate in its own 128-lane stripe.
        # Pad rows/lanes are exact zeros (also exact in bf16) -> pad-lane
        # invariant holds by construction.
        out = jnp.zeros((rows, 4 * Hp), f32)
        for s, g in enumerate(_GATE_ORDER):
            out = out.at[: wt.shape[0], s * Hp: s * Hp + H].set(
                wt[:, g * H:(g + 1) * H])
        return out

    wih_pad = pack_gate_cols(wih_t, I)    # (I, 4*Hp)
    whh_pad = pack_gate_cols(whh_t, Hp)   # (Hp, 4*Hp), rows H..Hp zero
    b_pad = jnp.zeros((1, 4 * Hp), f32)
    for s, g in enumerate(_GATE_ORDER):
        b_pad = b_pad.at[0, s * Hp: s * Hp + H].set(bias[g * H:(g + 1) * H])

    wlin_pad = jnp.zeros((Hp, Op), f32).at[:H, :O].set(
        jnp.transpose(w_lin).astype(f32))
    blin_pad = jnp.zeros((1, Op), f32).at[0, :O].set(b_lin.astype(f32))

    # bf16 weights on all MXU paths (accumulation stays f32 via
    # preferred_element_type). W_ih stays f32 when I == 1 because that path is
    # a VPU broadcast, not an MXU matmul.
    whh_pad = whh_pad.astype(bf16)
    wlin_pad = wlin_pad.astype(bf16)
    if I != 1:
        x2d = x2d.astype(bf16)
        wih_pad = wih_pad.astype(bf16)

    # Advisory cost estimate (uses padded dims, i.e. the work the HW does).
    cost = pl.CostEstimate(
        flops=(2 * T * B * I * 4 * Hp) + (2 * T * B * Hp * 4 * Hp)
              + (2 * B * Hp * Op),
        transcendentals=T * B * 5 * Hp,
        bytes_accessed=4 * (T * B * I + I * 4 * Hp + 4 * Hp + Op + B * Op)
                       + 2 * (Hp * 4 * Hp + Hp * Op),
    )

    vmem = pl.BlockSpec(memory_space=pltpu.MemorySpace.VMEM)
    out_pad = pl.pallas_call(
        _lstm_kernel,
        out_shape=jax.ShapeDtypeStruct((B, Op), f32),
        in_specs=[vmem] * 6,
        out_specs=vmem,
        cost_estimate=cost,
    )(x2d, wih_pad, whh_pad, b_pad, wlin_pad, blin_pad)
    return out_pad[:, :O]


def _reference(x_btd, w_ih, w_hh, b_ih, b_hh, w_lin, b_lin):
    """Pure-JAX reference of the PyTorch forward (original unpadded f32 math)."""
    B, T, I = x_btd.shape
    H = w_hh.shape[1]
    h = jnp.zeros((B, H), jnp.float32)
    c = jnp.zeros((B, H), jnp.float32)
    for t in range(T):
        g = x_btd[:, t, :] @ w_ih.T + h @ w_hh.T + b_ih + b_hh
        i_g = jax.nn.sigmoid(g[:, 0:H])
        f_g = jax.nn.sigmoid(g[:, H:2 * H])
        g_g = jnp.tanh(g[:, 2 * H:3 * H])
        o_g = jax.nn.sigmoid(g[:, 3 * H:4 * H])
        c = f_g * c + i_g * g_g
        h = o_g * jnp.tanh(c)
    return h @ w_lin.T + b_lin


if __name__ == "__main__":
    input_size = 1
    hidden = 50
    output_size = 1
    B, T = 1, 8  # module's hidden_cell has batch dim 1 -> batch must be 1

    key = jax.random.PRNGKey(0)
    ks = jax.random.split(key, 7)
    bound = 1.0 / np.sqrt(hidden)

    x = jax.random.normal(ks[0], (B, T, input_size), dtype=jnp.float32)
    w_ih = jax.random.uniform(ks[1], (4 * hidden, input_size), jnp.float32, -bound, bound)
    w_hh = jax.random.uniform(ks[2], (4 * hidden, hidden), jnp.float32, -bound, bound)
    b_ih = jax.random.uniform(ks[3], (4 * hidden,), jnp.float32, -bound, bound)
    b_hh = jax.random.uniform(ks[4], (4 * hidden,), jnp.float32, -bound, bound)
    w_lin = jax.random.uniform(ks[5], (output_size, hidden), jnp.float32, -bound, bound)
    b_lin = jax.random.uniform(ks[6], (output_size,), jnp.float32, -bound, bound)

    out = lstm_forward(x, w_ih, w_hh, b_ih, b_hh, w_lin, b_lin)
    out = jax.block_until_ready(out)

    ref = _reference(x, w_ih, w_hh, b_ih, b_hh, w_lin, b_lin)
    # Tolerance intentionally relaxed for bf16 MXU weights + approx reciprocal.
    np.testing.assert_allclose(np.asarray(out), np.asarray(ref), rtol=2e-2, atol=2e-2)

    print("KERNEL_OK")
</pallas_src>

<mosaic_0001>
module attributes {stable_mosaic.version = 11 : i64} {
  func.func @_lstm_kernel(%arg0: memref<8x1xf32, #tpu.memory_space<vmem>>, %arg1: memref<1x512xf32, #tpu.memory_space<vmem>>, %arg2: memref<128x512xbf16, #tpu.memory_space<vmem>>, %arg3: memref<1x512xf32, #tpu.memory_space<vmem>>, %arg4: memref<128x128xbf16, #tpu.memory_space<vmem>>, %arg5: memref<1x128xf32, #tpu.memory_space<vmem>>, %arg6: memref<1x128xf32, #tpu.memory_space<vmem>>) attributes {dimension_semantics = [], scalar_prefetch = 0 : i64, scratch_operands = 0 : i64, tpu.core_type = #tpu.core_type<tc>} {
    %c0 = arith.constant 0 : index
    %c0_0 = arith.constant 0 : index
    %0 = vector.load %arg0[%c0, %c0_0] : memref<8x1xf32, #tpu.memory_space<vmem>>, vector<8x1xf32>
    %c0_1 = arith.constant 0 : index
    %c0_2 = arith.constant 0 : index
    %1 = vector.load %arg1[%c0_1, %c0_2] : memref<1x512xf32, #tpu.memory_space<vmem>>, vector<1x512xf32>
    %2 = vector.broadcast %0 : vector<8x1xf32> to vector<8x512xf32>
    %3 = vector.broadcast %1 : vector<1x512xf32> to vector<8x512xf32>
    %4 = arith.mulf %2, %3 : vector<8x512xf32>
    %c0_3 = arith.constant 0 : index
    %c0_4 = arith.constant 0 : index
    %5 = vector.load %arg3[%c0_3, %c0_4] : memref<1x512xf32, #tpu.memory_space<vmem>>, vector<1x512xf32>
    %6 = vector.broadcast %5 : vector<1x512xf32> to vector<8x512xf32>
    %7 = arith.addf %4, %6 : vector<8x512xf32>
    %cst = arith.constant 0.000000e+00 : f32
    %8 = vector.broadcast %cst : f32 to vector<1x128xf32>
    %cst_5 = arith.constant 0.000000e+00 : f32
    %9 = vector.broadcast %cst_5 : f32 to vector<1x128xf32>
    %10 = arith.truncf %8 : vector<1x128xf32> to vector<1x128xbf16>
    %c0_6 = arith.constant 0 : index
    %c0_7 = arith.constant 0 : index
    %11 = vector.load %arg2[%c0_6, %c0_7] : memref<128x512xbf16, #tpu.memory_space<vmem>>, vector<128x512xbf16>
    %cst_8 = arith.constant dense<0.000000e+00> : vector<1x512xf32>
    %12 = tpu.matmul %10, %11, %cst_8 {dimension_numbers = #tpu.dot_dimension_numbers<[1], [0], [0], [1], [0, 0, 1, 1], [], []>} : vector<1x128xbf16>, vector<128x512xbf16>, vector<1x512xf32> -> vector<1x512xf32>
    %13 = vector.extract_strided_slice %7 {offsets = [0, 0], sizes = [1, 512], strides = [1, 1]} : vector<8x512xf32> to vector<1x512xf32>
    %14 = arith.addf %12, %13 : vector<1x512xf32>
    %15 = vector.extract_strided_slice %14 {offsets = [0, 0], sizes = [1, 384], strides = [1, 1]} : vector<1x512xf32> to vector<1x384xf32>
    %cst_9 = arith.constant 0.000000e+00 : f32
    %16 = vector.broadcast %cst_9 : f32 to vector<1x384xf32>
    %17 = arith.subf %16, %15 : vector<1x384xf32>
    %18 = math.exp %17 : vector<1x384xf32>
    %cst_10 = arith.constant 1.000000e+00 : f32
    %19 = vector.broadcast %cst_10 : f32 to vector<1x384xf32>
    %20 = arith.addf %19, %18 : vector<1x384xf32>
    %21 = tpu.reciprocal %20 {approx = true} : vector<1x384xf32> -> vector<1x384xf32>
    %22 = vector.extract_strided_slice %21 {offsets = [0, 0], sizes = [1, 128], strides = [1, 1]} : vector<1x384xf32> to vector<1x128xf32>
    %23 = vector.extract_strided_slice %21 {offsets = [0, 128], sizes = [1, 128], strides = [1, 1]} : vector<1x384xf32> to vector<1x128xf32>
    %24 = vector.extract_strided_slice %21 {offsets = [0, 256], sizes = [1, 128], strides = [1, 1]} : vector<1x384xf32> to vector<1x128xf32>
    %25 = vector.extract_strided_slice %14 {offsets = [0, 384], sizes = [1, 128], strides = [1, 1]} : vector<1x512xf32> to vector<1x128xf32>
    %26 = math.tanh %25 : vector<1x128xf32>
    %27 = arith.mulf %23, %9 : vector<1x128xf32>
    %28 = arith.mulf %22, %26 : vector<1x128xf32>
    %29 = arith.addf %27, %28 : vector<1x128xf32>
    %30 = math.tanh %29 : vector<1x128xf32>
    %31 = arith.mulf %24, %30 : vector<1x128xf32>
    %32 = arith.truncf %31 : vector<1x128xf32> to vector<1x128xbf16>
    %c0_11 = arith.constant 0 : index
    %c0_12 = arith.constant 0 : index
    %33 = vector.load %arg2[%c0_11, %c0_12] : memref<128x512xbf16, #tpu.memory_space<vmem>>, vector<128x512xbf16>
    %cst_13 = arith.constant dense<0.000000e+00> : vector<1x512xf32>
    %34 = tpu.matmul %32, %33, %cst_13 {dimension_numbers = #tpu.dot_dimension_numbers<[1], [0], [0], [1], [0, 0, 1, 1], [], []>} : vector<1x128xbf16>, vector<128x512xbf16>, vector<1x512xf32> -> vector<1x512xf32>
    %35 = vector.extract_strided_slice %7 {offsets = [1, 0], sizes = [1, 512], strides = [1, 1]} : vector<8x512xf32> to vector<1x512xf32>
    %36 = arith.addf %34, %35 : vector<1x512xf32>
    %37 = vector.extract_strided_slice %36 {offsets = [0, 0], sizes = [1, 384], strides = [1, 1]} : vector<1x512xf32> to vector<1x384xf32>
    %cst_14 = arith.constant 0.000000e+00 : f32
    %38 = vector.broadcast %cst_14 : f32 to vector<1x384xf32>
    %39 = arith.subf %38, %37 : vector<1x384xf32>
    %40 = math.exp %39 : vector<1x384xf32>
    %cst_15 = arith.constant 1.000000e+00 : f32
    %41 = vector.broadcast %cst_15 : f32 to vector<1x384xf32>
    %42 = arith.addf %41, %40 : vector<1x384xf32>
    %43 = tpu.reciprocal %42 {approx = true} : vector<1x384xf32> -> vector<1x384xf32>
    %44 = vector.extract_strided_slice %43 {offsets = [0, 0], sizes = [1, 128], strides = [1, 1]} : vector<1x384xf32> to vector<1x128xf32>
    %45 = vector.extract_strided_slice %43 {offsets = [0, 128], sizes = [1, 128], strides = [1, 1]} : vector<1x384xf32> to vector<1x128xf32>
    %46 = vector.extract_strided_slice %43 {offsets = [0, 256], sizes = [1, 128], strides = [1, 1]} : vector<1x384xf32> to vector<1x128xf32>
    %47 = vector.extract_strided_slice %36 {offsets = [0, 384], sizes = [1, 128], strides = [1, 1]} : vector<1x512xf32> to vector<1x128xf32>
    %48 = math.tanh %47 : vector<1x128xf32>
    %49 = arith.mulf %45, %29 : vector<1x128xf32>
    %50 = arith.mulf %44, %48 : vector<1x128xf32>
    %51 = arith.addf %49, %50 : vector<1x128xf32>
    %52 = math.tanh %51 : vector<1x128xf32>
    %53 = arith.mulf %46, %52 : vector<1x128xf32>
    %54 = arith.truncf %53 : vector<1x128xf32> to vector<1x128xbf16>
    %c0_16 = arith.constant 0 : index
    %c0_17 = arith.constant 0 : index
    %55 = vector.load %arg2[%c0_16, %c0_17] : memref<128x512xbf16, #tpu.memory_space<vmem>>, vector<128x512xbf16>
    %cst_18 = arith.constant dense<0.000000e+00> : vector<1x512xf32>
    %56 = tpu.matmul %54, %55, %cst_18 {dimension_numbers = #tpu.dot_dimension_numbers<[1], [0], [0], [1], [0, 0, 1, 1], [], []>} : vector<1x128xbf16>, vector<128x512xbf16>, vector<1x512xf32> -> vector<1x512xf32>
    %57 = vector.extract_strided_slice %7 {offsets = [2, 0], sizes = [1, 512], strides = [1, 1]} : vector<8x512xf32> to vector<1x512xf32>
    %58 = arith.addf %56, %57 : vector<1x512xf32>
    %59 = vector.extract_strided_slice %58 {offsets = [0, 0], sizes = [1, 384], strides = [1, 1]} : vector<1x512xf32> to vector<1x384xf32>
    %cst_19 = arith.constant 0.000000e+00 : f32
    %60 = vector.broadcast %cst_19 : f32 to vector<1x384xf32>
    %61 = arith.subf %60, %59 : vector<1x384xf32>
    %62 = math.exp %61 : vector<1x384xf32>
    %cst_20 = arith.constant 1.000000e+00 : f32
    %63 = vector.broadcast %cst_20 : f32 to vector<1x384xf32>
    %64 = arith.addf %63, %62 : vector<1x384xf32>
    %65 = tpu.reciprocal %64 {approx = true} : vector<1x384xf32> -> vector<1x384xf32>
    %66 = vector.extract_strided_slice %65 {offsets = [0, 0], sizes = [1, 128], strides = [1, 1]} : vector<1x384xf32> to vector<1x128xf32>
    %67 = vector.extract_strided_slice %65 {offsets = [0, 128], sizes = [1, 128], strides = [1, 1]} : vector<1x384xf32> to vector<1x128xf32>
    %68 = vector.extract_strided_slice %65 {offsets = [0, 256], sizes = [1, 128], strides = [1, 1]} : vector<1x384xf32> to vector<1x128xf32>
    %69 = vector.extract_strided_slice %58 {offsets = [0, 384], sizes = [1, 128], strides = [1, 1]} : vector<1x512xf32> to vector<1x128xf32>
    %70 = math.tanh %69 : vector<1x128xf32>
    %71 = arith.mulf %67, %51 : vector<1x128xf32>
    %72 = arith.mulf %66, %70 : vector<1x128xf32>
    %73 = arith.addf %71, %72 : vector<1x128xf32>
    %74 = math.tanh %73 : vector<1x128xf32>
    %75 = arith.mulf %68, %74 : vector<1x128xf32>
    %76 = arith.truncf %75 : vector<1x128xf32> to vector<1x128xbf16>
    %c0_21 = arith.constant 0 : index
    %c0_22 = arith.constant 0 : index
    %77 = vector.load %arg2[%c0_21, %c0_22] : memref<128x512xbf16, #tpu.memory_space<vmem>>, vector<128x512xbf16>
    %cst_23 = arith.constant dense<0.000000e+00> : vector<1x512xf32>
    %78 = tpu.matmul %76, %77, %cst_23 {dimension_numbers = #tpu.dot_dimension_numbers<[1], [0], [0], [1], [0, 0, 1, 1], [], []>} : vector<1x128xbf16>, vector<128x512xbf16>, vector<1x512xf32> -> vector<1x512xf32>
    %79 = vector.extract_strided_slice %7 {offsets = [3, 0], sizes = [1, 512], strides = [1, 1]} : vector<8x512xf32> to vector<1x512xf32>
    %80 = arith.addf %78, %79 : vector<1x512xf32>
    %81 = vector.extract_strided_slice %80 {offsets = [0, 0], sizes = [1, 384], strides = [1, 1]} : vector<1x512xf32> to vector<1x384xf32>
    %cst_24 = arith.constant 0.000000e+00 : f32
    %82 = vector.broadcast %cst_24 : f32 to vector<1x384xf32>
    %83 = arith.subf %82, %81 : vector<1x384xf32>
    %84 = math.exp %83 : vector<1x384xf32>
    %cst_25 = arith.constant 1.000000e+00 : f32
    %85 = vector.broadcast %cst_25 : f32 to vector<1x384xf32>
    %86 = arith.addf %85, %84 : vector<1x384xf32>
    %87 = tpu.reciprocal %86 {approx = true} : vector<1x384xf32> -> vector<1x384xf32>
    %88 = vector.extract_strided_slice %87 {offsets = [0, 0], sizes = [1, 128], strides = [1, 1]} : vector<1x384xf32> to vector<1x128xf32>
    %89 = vector.extract_strided_slice %87 {offsets = [0, 128], sizes = [1, 128], strides = [1, 1]} : vector<1x384xf32> to vector<1x128xf32>
    %90 = vector.extract_strided_slice %87 {offsets = [0, 256], sizes = [1, 128], strides = [1, 1]} : vector<1x384xf32> to vector<1x128xf32>
    %91 = vector.extract_strided_slice %80 {offsets = [0, 384], sizes = [1, 128], strides = [1, 1]} : vector<1x512xf32> to vector<1x128xf32>
    %92 = math.tanh %91 : vector<1x128xf32>
    %93 = arith.mulf %89, %73 : vector<1x128xf32>
    %94 = arith.mulf %88, %92 : vector<1x128xf32>
    %95 = arith.addf %93, %94 : vector<1x128xf32>
    %96 = math.tanh %95 : vector<1x128xf32>
    %97 = arith.mulf %90, %96 : vector<1x128xf32>
    %98 = arith.truncf %97 : vector<1x128xf32> to vector<1x128xbf16>
    %c0_26 = arith.constant 0 : index
    %c0_27 = arith.constant 0 : index
    %99 = vector.load %arg2[%c0_26, %c0_27] : memref<128x512xbf16, #tpu.memory_space<vmem>>, vector<128x512xbf16>
    %cst_28 = arith.constant dense<0.000000e+00> : vector<1x512xf32>
    %100 = tpu.matmul %98, %99, %cst_28 {dimension_numbers = #tpu.dot_dimension_numbers<[1], [0], [0], [1], [0, 0, 1, 1], [], []>} : vector<1x128xbf16>, vector<128x512xbf16>, vector<1x512xf32> -> vector<1x512xf32>
    %101 = vector.extract_strided_slice %7 {offsets = [4, 0], sizes = [1, 512], strides = [1, 1]} : vector<8x512xf32> to vector<1x512xf32>
    %102 = arith.addf %100, %101 : vector<1x512xf32>
    %103 = vector.extract_strided_slice %102 {offsets = [0, 0], sizes = [1, 384], strides = [1, 1]} : vector<1x512xf32> to vector<1x384xf32>
    %cst_29 = arith.constant 0.000000e+00 : f32
    %104 = vector.broadcast %cst_29 : f32 to vector<1x384xf32>
    %105 = arith.subf %104, %103 : vector<1x384xf32>
    %106 = math.exp %105 : vector<1x384xf32>
    %cst_30 = arith.constant 1.000000e+00 : f32
    %107 = vector.broadcast %cst_30 : f32 to vector<1x384xf32>
    %108 = arith.addf %107, %106 : vector<1x384xf32>
    %109 = tpu.reciprocal %108 {approx = true} : vector<1x384xf32> -> vector<1x384xf32>
    %110 = vector.extract_strided_slice %109 {offsets = [0, 0], sizes = [1, 128], strides = [1, 1]} : vector<1x384xf32> to vector<1x128xf32>
    %111 = vector.extract_strided_slice %109 {offsets = [0, 128], sizes = [1, 128], strides = [1, 1]} : vector<1x384xf32> to vector<1x128xf32>
    %112 = vector.extract_strided_slice %109 {offsets = [0, 256], sizes = [1, 128], strides = [1, 1]} : vector<1x384xf32> to vector<1x128xf32>
    %113 = vector.extract_strided_slice %102 {offsets = [0, 384], sizes = [1, 128], strides = [1, 1]} : vector<1x512xf32> to vector<1x128xf32>
    %114 = math.tanh %113 : vector<1x128xf32>
    %115 = arith.mulf %111, %95 : vector<1x128xf32>
    %116 = arith.mulf %110, %114 : vector<1x128xf32>
    %117 = arith.addf %115, %116 : vector<1x128xf32>
    %118 = math.tanh %117 : vector<1x128xf32>
    %119 = arith.mulf %112, %118 : vector<1x128xf32>
    %120 = arith.truncf %119 : vector<1x128xf32> to vector<1x128xbf16>
    %c0_31 = arith.constant 0 : index
    %c0_32 = arith.constant 0 : index
    %121 = vector.load %arg2[%c0_31, %c0_32] : memref<128x512xbf16, #tpu.memory_space<vmem>>, vector<128x512xbf16>
    %cst_33 = arith.constant dense<0.000000e+00> : vector<1x512xf32>
    %122 = tpu.matmul %120, %121, %cst_33 {dimension_numbers = #tpu.dot_dimension_numbers<[1], [0], [0], [1], [0, 0, 1, 1], [], []>} : vector<1x128xbf16>, vector<128x512xbf16>, vector<1x512xf32> -> vector<1x512xf32>
    %123 = vector.extract_strided_slice %7 {offsets = [5, 0], sizes = [1, 512], strides = [1, 1]} : vector<8x512xf32> to vector<1x512xf32>
    %124 = arith.addf %122, %123 : vector<1x512xf32>
    %125 = vector.extract_strided_slice %124 {offsets = [0, 0], sizes = [1, 384], strides = [1, 1]} : vector<1x512xf32> to vector<1x384xf32>
    %cst_34 = arith.constant 0.000000e+00 : f32
    %126 = vector.broadcast %cst_34 : f32 to vector<1x384xf32>
    %127 = arith.subf %126, %125 : vector<1x384xf32>
    %128 = math.exp %127 : vector<1x384xf32>
    %cst_35 = arith.constant 1.000000e+00 : f32
    %129 = vector.broadcast %cst_35 : f32 to vector<1x384xf32>
    %130 = arith.addf %129, %128 : vector<1x384xf32>
    %131 = tpu.reciprocal %130 {approx = true} : vector<1x384xf32> -> vector<1x384xf32>
    %132 = vector.extract_strided_slice %131 {offsets = [0, 0], sizes = [1, 128], strides = [1, 1]} : vector<1x384xf32> to vector<1x128xf32>
    %133 = vector.extract_strided_slice %131 {offsets = [0, 128], sizes = [1, 128], strides = [1, 1]} : vector<1x384xf32> to vector<1x128xf32>
    %134 = vector.extract_strided_slice %131 {offsets = [0, 256], sizes = [1, 128], strides = [1, 1]} : vector<1x384xf32> to vector<1x128xf32>
    %135 = vector.extract_strided_slice %124 {offsets = [0, 384], sizes = [1, 128], strides = [1, 1]} : vector<1x512xf32> to vector<1x128xf32>
    %136 = math.tanh %135 : vector<1x128xf32>
    %137 = arith.mulf %133, %117 : vector<1x128xf32>
    %138 = arith.mulf %132, %136 : vector<1x128xf32>
    %139 = arith.addf %137, %138 : vector<1x128xf32>
    %140 = math.tanh %139 : vector<1x128xf32>
    %141 = arith.mulf %134, %140 : vector<1x128xf32>
    %142 = arith.truncf %141 : vector<1x128xf32> to vector<1x128xbf16>
    %c0_36 = arith.constant 0 : index
    %c0_37 = arith.constant 0 : index
    %143 = vector.load %arg2[%c0_36, %c0_37] : memref<128x512xbf16, #tpu.memory_space<vmem>>, vector<128x512xbf16>
    %cst_38 = arith.constant dense<0.000000e+00> : vector<1x512xf32>
    %144 = tpu.matmul %142, %143, %cst_38 {dimension_numbers = #tpu.dot_dimension_numbers<[1], [0], [0], [1], [0, 0, 1, 1], [], []>} : vector<1x128xbf16>, vector<128x512xbf16>, vector<1x512xf32> -> vector<1x512xf32>
    %145 = vector.extract_strided_slice %7 {offsets = [6, 0], sizes = [1, 512], strides = [1, 1]} : vector<8x512xf32> to vector<1x512xf32>
    %146 = arith.addf %144, %145 : vector<1x512xf32>
    %147 = vector.extract_strided_slice %146 {offsets = [0, 0], sizes = [1, 384], strides = [1, 1]} : vector<1x512xf32> to vector<1x384xf32>
    %cst_39 = arith.constant 0.000000e+00 : f32
    %148 = vector.broadcast %cst_39 : f32 to vector<1x384xf32>
    %149 = arith.subf %148, %147 : vector<1x384xf32>
    %150 = math.exp %149 : vector<1x384xf32>
    %cst_40 = arith.constant 1.000000e+00 : f32
    %151 = vector.broadcast %cst_40 : f32 to vector<1x384xf32>
    %152 = arith.addf %151, %150 : vector<1x384xf32>
    %153 = tpu.reciprocal %152 {approx = true} : vector<1x384xf32> -> vector<1x384xf32>
    %154 = vector.extract_strided_slice %153 {offsets = [0, 0], sizes = [1, 128], strides = [1, 1]} : vector<1x384xf32> to vector<1x128xf32>
    %155 = vector.extract_strided_slice %153 {offsets = [0, 128], sizes = [1, 128], strides = [1, 1]} : vector<1x384xf32> to vector<1x128xf32>
    %156 = vector.extract_strided_slice %153 {offsets = [0, 256], sizes = [1, 128], strides = [1, 1]} : vector<1x384xf32> to vector<1x128xf32>
    %157 = vector.extract_strided_slice %146 {offsets = [0, 384], sizes = [1, 128], strides = [1, 1]} : vector<1x512xf32> to vector<1x128xf32>
    %158 = math.tanh %157 : vector<1x128xf32>
    %159 = arith.mulf %155, %139 : vector<1x128xf32>
    %160 = arith.mulf %154, %158 : vector<1x128xf32>
    %161 = arith.addf %159, %160 : vector<1x128xf32>
    %162 = math.tanh %161 : vector<1x128xf32>
    %163 = arith.mulf %156, %162 : vector<1x128xf32>
    %164 = arith.truncf %163 : vector<1x128xf32> to vector<1x128xbf16>
    %c0_41 = arith.constant 0 : index
    %c0_42 = arith.constant 0 : index
    %165 = vector.load %arg2[%c0_41, %c0_42] : memref<128x512xbf16, #tpu.memory_space<vmem>>, vector<128x512xbf16>
    %cst_43 = arith.constant dense<0.000000e+00> : vector<1x512xf32>
    %166 = tpu.matmul %164, %165, %cst_43 {dimension_numbers = #tpu.dot_dimension_numbers<[1], [0], [0], [1], [0, 0, 1, 1], [], []>} : vector<1x128xbf16>, vector<128x512xbf16>, vector<1x512xf32> -> vector<1x512xf32>
    %167 = vector.extract_strided_slice %7 {offsets = [7, 0], sizes = [1, 512], strides = [1, 1]} : vector<8x512xf32> to vector<1x512xf32>
    %168 = arith.addf %166, %167 : vector<1x512xf32>
    %169 = vector.extract_strided_slice %168 {offsets = [0, 0], sizes = [1, 384], strides = [1, 1]} : vector<1x512xf32> to vector<1x384xf32>
    %cst_44 = arith.constant 0.000000e+00 : f32
    %170 = vector.broadcast %cst_44 : f32 to vector<1x384xf32>
    %171 = arith.subf %170, %169 : vector<1x384xf32>
    %172 = math.exp %171 : vector<1x384xf32>
    %cst_45 = arith.constant 1.000000e+00 : f32
    %173 = vector.broadcast %cst_45 : f32 to vector<1x384xf32>
    %174 = arith.addf %173, %172 : vector<1x384xf32>
    %175 = tpu.reciprocal %174 {approx = true} : vector<1x384xf32> -> vector<1x384xf32>
    %176 = vector.extract_strided_slice %175 {offsets = [0, 0], sizes = [1, 128], strides = [1, 1]} : vector<1x384xf32> to vector<1x128xf32>
    %177 = vector.extract_strided_slice %175 {offsets = [0, 128], sizes = [1, 128], strides = [1, 1]} : vector<1x384xf32> to vector<1x128xf32>
    %178 = vector.extract_strided_slice %175 {offsets = [0, 256], sizes = [1, 128], strides = [1, 1]} : vector<1x384xf32> to vector<1x128xf32>
    %179 = vector.extract_strided_slice %168 {offsets = [0, 384], sizes = [1, 128], strides = [1, 1]} : vector<1x512xf32> to vector<1x128xf32>
    %180 = math.tanh %179 : vector<1x128xf32>
    %181 = arith.mulf %177, %161 : vector<1x128xf32>
    %182 = arith.mulf %176, %180 : vector<1x128xf32>
    %183 = arith.addf %181, %182 : vector<1x128xf32>
    %184 = math.tanh %183 : vector<1x128xf32>
    %185 = arith.mulf %178, %184 : vector<1x128xf32>
    %186 = arith.truncf %185 : vector<1x128xf32> to vector<1x128xbf16>
    %c0_46 = arith.constant 0 : index
    %c0_47 = arith.constant 0 : index
    %187 = vector.load %arg4[%c0_46, %c0_47] : memref<128x128xbf16, #tpu.memory_space<vmem>>, vector<128x128xbf16>
    %cst_48 = arith.constant dense<0.000000e+00> : vector<1x128xf32>
    %188 = tpu.matmul %186, %187, %cst_48 {dimension_numbers = #tpu.dot_dimension_numbers<[1], [0], [0], [1], [0, 0, 1, 1], [], []>} : vector<1x128xbf16>, vector<128x128xbf16>, vector<1x128xf32> -> vector<1x128xf32>
    %c0_49 = arith.constant 0 : index
    %c0_50 = arith.constant 0 : index
    %189 = vector.load %arg5[%c0_49, %c0_50] : memref<1x128xf32, #tpu.memory_space<vmem>>, vector<1x128xf32>
    %190 = arith.addf %188, %189 : vector<1x128xf32>
    %c0_51 = arith.constant 0 : index
    %c0_52 = arith.constant 0 : index
    %191 = vector.load %arg6[%c0_51, %c0_52] : memref<1x128xf32, #tpu.memory_space<vmem>>, vector<1x128xf32>
    tpu.vector_store %arg6[%c0_51, %c0_52], %190 {strides = array<i32>} : memref<1x128xf32, #tpu.memory_space<vmem>>, vector<1x128xf32>,
    return
  }
}

</mosaic_0001>

<llo_original>
// kernel: tpu_custom_call.1
$region0: #{tpu_custom_call.1}
  #allocation0 [shape = 'u32[]', space=smem, size = 0x4, offset = 0x4, fixed_abs, tag = 'smem constant byte address 0x4 - core index']
  #allocation1 [shape = 'u32[144,128]{1,0:T(1,128)}', space=vmem, size = 0x12000, scoped, tag = 'internal scratch']
  %s0 = inlined_call_operand.vmem [shape: f32[8,1], index: 0, kind: input, shape index: {}]
  %s1 = inlined_call_operand.vmem [shape: f32[1,512], index: 1, kind: input, shape index: {}]
  %s2 = inlined_call_operand.hbm [shape: bf16[128,512], index: 2, kind: input, shape index: {}]
  %s3 = inlined_call_operand.vmem [shape: f32[1,512], index: 3, kind: input, shape index: {}]
  %s4 = inlined_call_operand.hbm [shape: bf16[128,128], index: 4, kind: input, shape index: {}]
  %s5 = inlined_call_operand.vmem [shape: f32[1,128], index: 5, kind: input, shape index: {}]
  %s6 = inlined_call_operand.hbm [shape: f32[1,128], index: 6, kind: output, shape index: {}]
  %s7 = sld [smem:[#allocation0]]
  $region42: #{tpu_custom_call.1} parent=0
    _
  %s9 = ssub.s32 1, %s7
  %s10 = scalar_select 0, %s9, %s7
  $region1: #{tpu_custom_call.1} parent=0
    #allocation2 [shape = 'u8[131072]{0}', space=vmem, size = 0x20000, scoped, tag = 'input window, operand 2, single buffered']
    #allocation3 [shape = 's32[1]{0}', space=sflag, size = 0x4, scoped, tag = 'scoped memory for tpu_custom_call.1']
    #allocation4 [shape = 's32[1]{0}', space=sflag, size = 0x4, scoped, tag = 'scoped memory for tpu_custom_call.1']
    #allocation5 [shape = 'u8[32768]{0}', space=vmem, size = 0x8000, scoped, tag = 'input window, operand 4, single buffered']
    #allocation6 [shape = 's32[1]{0}', space=sflag, size = 0x4, scoped, tag = 'scoped memory for tpu_custom_call.1']
    #allocation7 [shape = 'u8[512]{0}', space=vmem, size = 0x400, scoped, tag = 'output window, operand 0, single buffered']
    %11 = vsyncpa [#allocation3], 0
    %12 = vsyncpa [#allocation6], 0
    %13 = vsyncpa [#allocation4], 0
    // Predicated region
    $region2: #{tpu_custom_call.1} parent=1 // pred_check
      _
    $region3: #{tpu_custom_call.1} parent=1 // pred_check_branch
      %15 = sbr.rel (0) target = $region5
    $region4: #{tpu_custom_call.1} parent=1 // pred_region
      _
    $region5: #{tpu_custom_call.1} parent=1 // pred_fallthru
      _
    // Predicated region
    $region6: #{tpu_custom_call.1} parent=1 // pred_check
      _
    $region7: #{tpu_custom_call.1} parent=1 // pred_check_branch
      %17 = sbr.rel (0) target = $region9
    $region8: #{tpu_custom_call.1} parent=1 // pred_region
      _
    $region9: #{tpu_custom_call.1} parent=1 // pred_fallthru
      _
    // Predicated region
    $region10: #{tpu_custom_call.1} parent=1 // pred_check
      _
    $region11: #{tpu_custom_call.1} parent=1 // pred_check_branch
      %19 = sbr.rel (0) target = $region13
    $region12: #{tpu_custom_call.1} parent=1 // pred_region
      %s21 = ssub.s32 4096, 4096
      %22 = vsyncadd [#allocation3], %s21
      %s23 = sshll.u32 [#allocation2], 4
      %s24 = int_to_ptr.vmem [resolvable:$true] %s23
      %29 = dma.hbm_to_vmem [thread:$0]  %s2, 4096, %s24, [#allocation3], 256, 256, 16
    $region13: #{tpu_custom_call.1} parent=1 // pred_fallthru
      _
    // Predicated region
    $region14: #{tpu_custom_call.1} parent=1 // pred_check
      _
    $region15: #{tpu_custom_call.1} parent=1 // pred_check_branch
      %31 = sbr.rel (0) target = $region17
    $region16: #{tpu_custom_call.1} parent=1 // pred_region
      _
    $region17: #{tpu_custom_call.1} parent=1 // pred_fallthru
      _
    // Predicated region
    $region18: #{tpu_custom_call.1} parent=1 // pred_check
      _
    $region19: #{tpu_custom_call.1} parent=1 // pred_check_branch
      %33 = sbr.rel (0) target = $region21
    $region20: #{tpu_custom_call.1} parent=1 // pred_region
      %s35 = ssub.s32 1024, 1024
      %36 = vsyncadd [#allocation6], %s35
      %s37 = sshll.u32 [#allocation5], 4
      %s38 = int_to_ptr.vmem [resolvable:$true] %s37
      %43 = dma.hbm_to_vmem [thread:$0]  %s4, 1024, %s38, [#allocation6], 64, 64, 4
    $region21: #{tpu_custom_call.1} parent=1 // pred_fallthru
      _
    // Predicated region
    $region22: #{tpu_custom_call.1} parent=1 // pred_check
      _
    $region23: #{tpu_custom_call.1} parent=1 // pred_check_branch
      %45 = sbr.rel (0) target = $region25
    $region24: #{tpu_custom_call.1} parent=1 // pred_region
      _
    $region25: #{tpu_custom_call.1} parent=1 // pred_fallthru
      _
    // Predicated region
    $region26: #{tpu_custom_call.1} parent=1 // pred_check
      _
    $region27: #{tpu_custom_call.1} parent=1 // pred_check_branch
      %47 = sbr.rel (0) target = $region29
    $region28: #{tpu_custom_call.1} parent=1 // pred_region
      %48 = dma.done [#allocation3], 4096
    $region29: #{tpu_custom_call.1} parent=1 // pred_fallthru
      _
    // Predicated region
    $region30: #{tpu_custom_call.1} parent=1 // pred_check
      _
    $region31: #{tpu_custom_call.1} parent=1 // pred_check_branch
      %50 = sbr.rel (0) target = $region33
    $region32: #{tpu_custom_call.1} parent=1 // pred_region
      %51 = dma.done [#allocation6], 1024
    $region33: #{tpu_custom_call.1} parent=1 // pred_fallthru
      _
    %v53 = vld [vmem:[%s0] sm:$0xff]
    %v54 = vld [vmem:[%s1] sm:$0xf]
    %56 = vset.pattern.permute.xlu0 0
    %57 = vperm.xlu0 %56, %v53
    %v58 = vpop.permute.xlu0 %57
    %v61 = vlaneseq
    %v62 = vshrl.u32 %v61, 7
    %v63 = vsub.s32 0, %v62
    %v64 = vrot.slane %v54, %v63
    %v65 = vlaneseq
    %v66 = vshrl.u32 %v65, 7
    %v67 = vsub.s32 1, %v66
    %v68 = vrot.slane %v54, %v67
    %v69 = vlaneseq
    %v70 = vshrl.u32 %v69, 7
    %v71 = vsub.s32 2, %v70
    %v72 = vrot.slane %v54, %v71
    %v73 = vlaneseq
    %v74 = vshrl.u32 %v73, 7
    %v75 = vsub.s32 3, %v74
    %v76 = vrot.slane %v54, %v75
    %v81 = vmul.f32 %v58, %v64
    %v82 = vmul.f32 %v58, %v68
    %v83 = vmul.f32 %v58, %v72
    %v84 = vmul.f32 %v58, %v76
    %v85 = vld [vmem:[%s3] sm:$0xf]
    %v87 = vlaneseq
    %v88 = vshrl.u32 %v87, 7
    %v89 = vsub.s32 0, %v88
    %v90 = vrot.slane %v85, %v89
    %v91 = vlaneseq
    %v92 = vshrl.u32 %v91, 7
    %v93 = vsub.s32 1, %v92
    %v94 = vrot.slane %v85, %v93
    %v95 = vlaneseq
    %v96 = vshrl.u32 %v95, 7
    %v97 = vsub.s32 2, %v96
    %v98 = vrot.slane %v85, %v97
    %v99 = vlaneseq
    %v100 = vshrl.u32 %v99, 7
    %v101 = vsub.s32 3, %v100
    %v102 = vrot.slane %v85, %v101
    %v107 = vadd.f32 %v81, %v90
    %v108 = vadd.f32 %v82, %v94
    %v109 = vadd.f32 %v83, %v98
    %v110 = vadd.f32 %v84, %v102
    %v111 = vld [vmem:[#allocation2] sm:$0xff]
    %v112 = vld [vmem:[#allocation2 + $0x8] sm:$0xff]
    %v113 = vld [vmem:[#allocation2 + $0x10] sm:$0xff]
    %v114 = vld [vmem:[#allocation2 + $0x18] sm:$0xff]
    %v115 = vld [vmem:[#allocation2 + $0x20] sm:$0xff]
    %v116 = vld [vmem:[#allocation2 + $0x28] sm:$0xff]
    %v117 = vld [vmem:[#allocation2 + $0x30] sm:$0xff]
    %v118 = vld [vmem:[#allocation2 + $0x38] sm:$0xff]
    %v119 = vld [vmem:[#allocation2 + $0x40] sm:$0xff]
    %v120 = vld [vmem:[#allocation2 + $0x48] sm:$0xff]
    %v121 = vld [vmem:[#allocation2 + $0x50] sm:$0xff]
    %v122 = vld [vmem:[#allocation2 + $0x58] sm:$0xff]
    %v123 = vld [vmem:[#allocation2 + $0x60] sm:$0xff]
    %v124 = vld [vmem:[#allocation2 + $0x68] sm:$0xff]
    %v125 = vld [vmem:[#allocation2 + $0x70] sm:$0xff]
    %v126 = vld [vmem:[#allocation2 + $0x78] sm:$0xff]
    %v127 = vld [vmem:[#allocation2 + $0x80] sm:$0xff]
    %v128 = vld [vmem:[#allocation2 + $0x88] sm:$0xff]
    %v129 = vld [vmem:[#allocation2 + $0x90] sm:$0xff]
    %v130 = vld [vmem:[#allocation2 + $0x98] sm:$0xff]
    %v131 = vld [vmem:[#allocation2 + $0xa0] sm:$0xff]
    %v132 = vld [vmem:[#allocation2 + $0xa8] sm:$0xff]
    %v133 = vld [vmem:[#allocation2 + $0xb0] sm:$0xff]
    %v134 = vld [vmem:[#allocation2 + $0xb8] sm:$0xff]
    %v135 = vld [vmem:[#allocation2 + $0xc0] sm:$0xff]
    %v136 = vld [vmem:[#allocation2 + $0xc8] sm:$0xff]
    %v137 = vld [vmem:[#allocation2 + $0xd0] sm:$0xff]
    %v138 = vld [vmem:[#allocation2 + $0xd8] sm:$0xff]
    %v139 = vld [vmem:[#allocation2 + $0xe0] sm:$0xff]
    %v140 = vld [vmem:[#allocation2 + $0xe8] sm:$0xff]
    %v141 = vld [vmem:[#allocation2 + $0xf0] sm:$0xff]
    %v142 = vld [vmem:[#allocation2 + $0xf8] sm:$0xff]
    %v175 = vunpack.c.l.b16 %v111
    %v176 = vunpack.c.h.b16 %v111
    %v177 = vunpack.c.l.b16 %v112
    %v178 = vunpack.c.h.b16 %v112
    %v179 = vunpack.c.l.b16 %v113
    %v180 = vunpack.c.h.b16 %v113
    %v181 = vunpack.c.l.b16 %v114
    %v182 = vunpack.c.h.b16 %v114
    %v183 = vunpack.c.l.b16 %v115
    %v184 = vunpack.c.h.b16 %v115
    %v185 = vunpack.c.l.b16 %v116
    %v186 = vunpack.c.h.b16 %v116
    %v187 = vunpack.c.l.b16 %v117
    %v188 = vunpack.c.h.b16 %v117
    %v189 = vunpack.c.l.b16 %v118
    %v190 = vunpack.c.h.b16 %v118
    %v191 = vunpack.c.l.b16 %v119
    %v192 = vunpack.c.h.b16 %v119
    %v193 = vunpack.c.l.b16 %v120
    %v194 = vunpack.c.h.b16 %v120
    %v195 = vunpack.c.l.b16 %v121
    %v196 = vunpack.c.h.b16 %v121
    %v197 = vunpack.c.l.b16 %v122
    %v198 = vunpack.c.h.b16 %v122
    %v199 = vunpack.c.l.b16 %v123
    %v200 = vunpack.c.h.b16 %v123
    %v201 = vunpack.c.l.b16 %v124
    %v202 = vunpack.c.h.b16 %v124
    %v203 = vunpack.c.l.b16 %v125
    %v204 = vunpack.c.h.b16 %v125
    %v205 = vunpack.c.l.b16 %v126
    %v206 = vunpack.c.h.b16 %v126
    %v207 = vunpack.c.l.b16 %v127
    %v208 = vunpack.c.h.b16 %v127
    %v209 = vunpack.c.l.b16 %v128
    %v210 = vunpack.c.h.b16 %v128
    %v211 = vunpack.c.l.b16 %v129
    %v212 = vunpack.c.h.b16 %v129
    %v213 = vunpack.c.l.b16 %v130
    %v214 = vunpack.c.h.b16 %v130
    %v215 = vunpack.c.l.b16 %v131
    %v216 = vunpack.c.h.b16 %v131
    %v217 = vunpack.c.l.b16 %v132
    %v218 = vunpack.c.h.b16 %v132
    %v219 = vunpack.c.l.b16 %v133
    %v220 = vunpack.c.h.b16 %v133
    %v221 = vunpack.c.l.b16 %v134
    %v222 = vunpack.c.h.b16 %v134
    %v223 = vunpack.c.l.b16 %v135
    %v224 = vunpack.c.h.b16 %v135
    %v225 = vunpack.c.l.b16 %v136
    %v226 = vunpack.c.h.b16 %v136
    %v227 = vunpack.c.l.b16 %v137
    %v228 = vunpack.c.h.b16 %v137
    %v229 = vunpack.c.l.b16 %v138
    %v230 = vunpack.c.h.b16 %v138
    %v231 = vunpack.c.l.b16 %v139
    %v232 = vunpack.c.h.b16 %v139
    %v233 = vunpack.c.l.b16 %v140
    %v234 = vunpack.c.h.b16 %v140
    %v235 = vunpack.c.l.b16 %v141
    %v236 = vunpack.c.h.b16 %v141
    %v237 = vunpack.c.l.b16 %v142
    %v238 = vunpack.c.h.b16 %v142
    %v239 = vpack.c.b16 %v179, %v175
    %v240 = vpack.c.b16 %v180, %v176
    %v241 = vpack.c.b16 %v181, %v177
    %v242 = vpack.c.b16 %v182, %v178
    %v243 = vpack.c.b16 %v187, %v183
    %v244 = vpack.c.b16 %v188, %v184
    %v245 = vpack.c.b16 %v189, %v185
    %v246 = vpack.c.b16 %v190, %v186
    %v247 = vpack.c.b16 %v195, %v191
    %v248 = vpack.c.b16 %v196, %v192
    %v249 = vpack.c.b16 %v197, %v193
    %v250 = vpack.c.b16 %v198, %v194
    %v251 = vpack.c.b16 %v203, %v199
    %v252 = vpack.c.b16 %v204, %v200
    %v253 = vpack.c.b16 %v205, %v201
    %v254 = vpack.c.b16 %v206, %v202
    %v255 = vpack.c.b16 %v211, %v207
    %v256 = vpack.c.b16 %v212, %v208
    %v257 = vpack.c.b16 %v213, %v209
    %v258 = vpack.c.b16 %v214, %v210
    %v259 = vpack.c.b16 %v219, %v215
    %v260 = vpack.c.b16 %v220, %v216
    %v261 = vpack.c.b16 %v221, %v217
    %v262 = vpack.c.b16 %v222, %v218
    %v263 = vpack.c.b16 %v227, %v223
    %v264 = vpack.c.b16 %v228, %v224
    %v265 = vpack.c.b16 %v229, %v225
    %v266 = vpack.c.b16 %v230, %v226
    %v267 = vpack.c.b16 %v235, %v231
    %v268 = vpack.c.b16 %v236, %v232
    %v269 = vpack.c.b16 %v237, %v233
    %v270 = vpack.c.b16 %v238, %v234
    %303 = vmatprep.subr.bf16.mxu0 %v268
    %304 = vmatpush1.bf16.msra.mxu0 %v267
    %305 = vmatprep.subr.bf16.mxu0 %v264
    %306 = vmatpush1.bf16.msra.mxu0 %v263
    %307 = vmatprep.subr.bf16.mxu0 %v260
    %308 = vmatpush1.bf16.msra.mxu0 %v259
    %309 = vmatprep.subr.bf16.mxu0 %v256
    %310 = vmatpush1.bf16.msra.mxu0 %v255
    %311 = vmatprep.subr.bf16.mxu0 %v252
    %312 = vmatpush1.bf16.msra.mxu0 %v251
    %313 = vmatprep.subr.bf16.mxu0 %v248
    %314 = vmatpush1.bf16.msra.mxu0 %v247
    %315 = vmatprep.subr.bf16.mxu0 %v244
    %316 = vmatpush1.bf16.msra.mxu0 %v243
    %317 = vmatprep.subr.bf16.mxu0 %v240
    %318 = vmatpush1.bf16.msra.mxu0 %v239
    %319 = vmatprep.subr.bf16.mxu0 0
    %320 = vmatpush2.bf16.msra.mxu0 0
    %321 = vmatprep.subr.bf16.mxu0 0
    %322 = vmatpush2.bf16.msra.mxu0 0
    %323 = vmatprep.subr.bf16.mxu0 0
    %324 = vmatpush2.bf16.msra.mxu0 0
    %325 = vmatprep.subr.bf16.mxu0 0
    %326 = vmatpush2.bf16.msra.mxu0 0
    %327 = vmatprep.subr.bf16.mxu0 0
    %328 = vmatpush2.bf16.msra.mxu0 0
    %329 = vmatprep.subr.bf16.mxu0 0
    %330 = vmatpush2.bf16.msra.mxu0 0
    %331 = vmatprep.subr.bf16.mxu0 0
    %332 = vmatpush2.bf16.msra.mxu0 0
    %333 = vmatprep.subr.bf16.mxu0 0
    %334 = vmatpush2.bf16.msra.mxu0 0
    %335 = vmatprep.mubr.bf16.mxu0 0
    %336 = vmatmul.mubr.bf16.gmra.mxu0 0
    %v337 = vpop.f32.mrf.mxu0
    %v338 = vadd.f32 %v107, %v337
    %v339 = vpop.f32.mrf.mxu0
    %v340 = vadd.f32 %v108, %v339
    %v341 = vpop.f32.mrf.mxu0
    %v342 = vpop.f32.mrf.mxu0
    %343 = vdwg.mxu0
    %344 = vmatprep.subr.bf16.mxu0 %v270
    %345 = vmatpush1.bf16.msra.mxu0 %v269
    %346 = vmatprep.subr.bf16.mxu0 %v266
    %347 = vmatpush1.bf16.msra.mxu0 %v265
    %348 = vmatprep.subr.bf16.mxu0 %v262
    %349 = vmatpush1.bf16.msra.mxu0 %v261
    %350 = vmatprep.subr.bf16.mxu0 %v258
    %351 = vmatpush1.bf16.msra.mxu0 %v257
    %352 = vmatprep.subr.bf16.mxu0 %v254
    %353 = vmatpush1.bf16.msra.mxu0 %v253
    %354 = vmatprep.subr.bf16.mxu0 %v250
    %355 = vmatpush1.bf16.msra.mxu0 %v249
    %356 = vmatprep.subr.bf16.mxu0 %v246
    %357 = vmatpush1.bf16.msra.mxu0 %v245
    %358 = vmatprep.subr.bf16.mxu0 %v242
    %359 = vmatpush1.bf16.msra.mxu0 %v241
    %360 = vmatprep.subr.bf16.mxu0 0
    %361 = vmatpush2.bf16.msra.mxu0 0
    %362 = vmatprep.subr.bf16.mxu0 0
    %363 = vmatpush2.bf16.msra.mxu0 0
    %364 = vmatprep.subr.bf16.mxu0 0
    %365 = vmatpush2.bf16.msra.mxu0 0
    %366 = vmatprep.subr.bf16.mxu0 0
    %367 = vmatpush2.bf16.msra.mxu0 0
    %368 = vmatprep.subr.bf16.mxu0 0
    %369 = vmatpush2.bf16.msra.mxu0 0
    %370 = vmatprep.subr.bf16.mxu0 0
    %371 = vmatpush2.bf16.msra.mxu0 0
    %372 = vmatprep.subr.bf16.mxu0 0
    %373 = vmatpush2.bf16.msra.mxu0 0
    %374 = vmatprep.subr.bf16.mxu0 0
    %375 = vmatpush2.bf16.msra.mxu0 0
    %376 = vmatprep.mubr.bf16.mxu0 0
    %377 = vmatmul.mubr.bf16.gmra.mxu0 0
    %v378 = vpop.f32.mrf.mxu0
    %v379 = vadd.f32 %v109, %v378
    %v380 = vpop.f32.mrf.mxu0
    %v381 = vadd.f32 %v110, %v380
    %v382 = vpop.f32.mrf.mxu0
    %v383 = vpop.f32.mrf.mxu0
    %384 = vdwg.mxu0
    %v385 = vsub.f32 0.0, %v338
    %v386 = vsub.f32 0.0, %v340
    %v387 = vsub.f32 0.0, %v379
    %v388 = vmul.f32 %v385, 1.442695
    %v389 = vpow.pop %v388
    %v390 = vmul.f32 %v386, 1.442695
    %v391 = vpow.pop %v390
    %v392 = vmul.f32 %v387, 1.442695
    %v393 = vpow.pop %v392
    %v394 = vadd.f32 %v389, 1.0
    %v395 = vadd.f32 %v391, 1.0
    %v396 = vadd.f32 %v393, 1.0
    %v397 = vrcp.pop %v394
    %v398 = vrcp.pop %v395
    %v399 = vrcp.pop %v396
    %v400 = vtanh.pop %v381
    %v401 = vmul.f32 %v398, 0.0
    %v402 = vmul.f32 %v397, %v400
    %v403 = vadd.f32 %v401, %v402
    %v404 = vtanh.pop %v403
    %v405 = vmul.f32 %v399, %v404
    %v406 = vpack.c.bf16 %v405, %v405
    %v411 = vrot.slane %v107, 1
    %v412 = vrot.slane %v108, 1
    %v413 = vrot.slane %v109, 1
    %v414 = vrot.slane %v110, 1
    %419 = vmatprep.subr.bf16.mxu0 %v268
    %420 = vmatpush1.bf16.msra.mxu0 %v267
    %421 = vmatprep.subr.bf16.mxu0 %v264
    %422 = vmatpush1.bf16.msra.mxu0 %v263
    %423 = vmatprep.subr.bf16.mxu0 %v260
    %424 = vmatpush1.bf16.msra.mxu0 %v259
    %425 = vmatprep.subr.bf16.mxu0 %v256
    %426 = vmatpush1.bf16.msra.mxu0 %v255
    %427 = vmatprep.subr.bf16.mxu0 %v252
    %428 = vmatpush1.bf16.msra.mxu0 %v251
    %429 = vmatprep.subr.bf16.mxu0 %v248
    %430 = vmatpush1.bf16.msra.mxu0 %v247
    %431 = vmatprep.subr.bf16.mxu0 %v244
    %432 = vmatpush1.bf16.msra.mxu0 %v243
    %433 = vmatprep.subr.bf16.mxu0 %v240
    %434 = vmatpush1.bf16.msra.mxu0 %v239
    %435 = vmatprep.subr.bf16.mxu0 0
    %436 = vmatpush2.bf16.msra.mxu0 0
    %437 = vmatprep.subr.bf16.mxu0 0
    %438 = vmatpush2.bf16.msra.mxu0 0
    %439 = vmatprep.subr.bf16.mxu0 0
    %440 = vmatpush2.bf16.msra.mxu0 0
    %441 = vmatprep.subr.bf16.mxu0 0
    %442 = vmatpush2.bf16.msra.mxu0 0
    %443 = vmatprep.subr.bf16.mxu0 0
    %444 = vmatpush2.bf16.msra.mxu0 0
    %445 = vmatprep.subr.bf16.mxu0 0
    %446 = vmatpush2.bf16.msra.mxu0 0
    %447 = vmatprep.subr.bf16.mxu0 0
    %448 = vmatpush2.bf16.msra.mxu0 0
    %449 = vmatprep.subr.bf16.mxu0 0
    %450 = vmatpush2.bf16.msra.mxu0 0
    %451 = vmatprep.mubr.bf16.mxu0 0
    %452 = vmatmul.mubr.bf16.gmra.mxu0 %v406
    %v453 = vpop.f32.mrf.mxu0
    %v454 = vadd.f32 %v411, %v453
    %v455 = vpop.f32.mrf.mxu0
    %v456 = vadd.f32 %v412, %v455
    %v457 = vpop.f32.mrf.mxu0
    %v458 = vpop.f32.mrf.mxu0
    %459 = vdwg.mxu0
    %460 = vmatprep.subr.bf16.mxu0 %v270
    %461 = vmatpush1.bf16.msra.mxu0 %v269
    %462 = vmatprep.subr.bf16.mxu0 %v266
    %463 = vmatpush1.bf16.msra.mxu0 %v265
    %464 = vmatprep.subr.bf16.mxu0 %v262
    %465 = vmatpush1.bf16.msra.mxu0 %v261
    %466 = vmatprep.subr.bf16.mxu0 %v258
    %467 = vmatpush1.bf16.msra.mxu0 %v257
    %468 = vmatprep.subr.bf16.mxu0 %v254
    %469 = vmatpush1.bf16.msra.mxu0 %v253
    %470 = vmatprep.subr.bf16.mxu0 %v250
    %471 = vmatpush1.bf16.msra.mxu0 %v249
    %472 = vmatprep.subr.bf16.mxu0 %v246
    %473 = vmatpush1.bf16.msra.mxu0 %v245
    %474 = vmatprep.subr.bf16.mxu0 %v242
    %475 = vmatpush1.bf16.msra.mxu0 %v241
    %476 = vmatprep.subr.bf16.mxu0 0
    %477 = vmatpush2.bf16.msra.mxu0 0
    %478 = vmatprep.subr.bf16.mxu0 0
    %479 = vmatpush2.bf16.msra.mxu0 0
    %480 = vmatprep.subr.bf16.mxu0 0
    %481 = vmatpush2.bf16.msra.mxu0 0
    %482 = vmatprep.subr.bf16.mxu0 0
    %483 = vmatpush2.bf16.msra.mxu0 0
    %484 = vmatprep.subr.bf16.mxu0 0
    %485 = vmatpush2.bf16.msra.mxu0 0
    %486 = vmatprep.subr.bf16.mxu0 0
    %487 = vmatpush2.bf16.msra.mxu0 0
    %488 = vmatprep.subr.bf16.mxu0 0
    %489 = vmatpush2.bf16.msra.mxu0 0
    %490 = vmatprep.subr.bf16.mxu0 0
    %491 = vmatpush2.bf16.msra.mxu0 0
    %492 = vmatprep.mubr.bf16.mxu0 0
    %493 = vmatmul.mubr.bf16.gmra.mxu0 %v406
    %v494 = vpop.f32.mrf.mxu0
    %v495 = vadd.f32 %v413, %v494
    %v496 = vpop.f32.mrf.mxu0
    %v497 = vadd.f32 %v414, %v496
    %v498 = vpop.f32.mrf.mxu0
    %v499 = vpop.f32.mrf.mxu0
    %500 = vdwg.mxu0
    %v501 = vsub.f32 0.0, %v454
    %v502 = vsub.f32 0.0, %v456
    %v503 = vsub.f32 0.0, %v495
    %v504 = vmul.f32 %v501, 1.442695
    %v505 = vpow.pop %v504
    %v506 = vmul.f32 %v502, 1.442695
    %v507 = vpow.pop %v506
    %v508 = vmul.f32 %v503, 1.442695
    %v509 = vpow.pop %v508
    %v510 = vadd.f32 %v505, 1.0
    %v511 = vadd.f32 %v507, 1.0
    %v512 = vadd.f32 %v509, 1.0
    %v513 = vrcp.pop %v510
    %v514 = vrcp.pop %v511
    %v515 = vrcp.pop %v512
    %v516 = vtanh.pop %v497
    %v517 = vmul.f32 %v514, %v403
    %v518 = vmul.f32 %v513, %v516
    %v519 = vadd.f32 %v517, %v518
    %v520 = vtanh.pop %v519
    %v521 = vmul.f32 %v515, %v520
    %v522 = vpack.c.bf16 %v521, %v521
    %v523 = vrot.slane %v107, 2
    %v524 = vrot.slane %v108, 2
    %v525 = vrot.slane %v109, 2
    %v526 = vrot.slane %v110, 2
    %531 = vmatprep.subr.bf16.mxu0 %v268
    %532 = vmatpush1.bf16.msra.mxu0 %v267
    %533 = vmatprep.subr.bf16.mxu0 %v264
    %534 = vmatpush1.bf16.msra.mxu0 %v263
    %535 = vmatprep.subr.bf16.mxu0 %v260
    %536 = vmatpush1.bf16.msra.mxu0 %v259
    %537 = vmatprep.subr.bf16.mxu0 %v256
    %538 = vmatpush1.bf16.msra.mxu0 %v255
    %539 = vmatprep.subr.bf16.mxu0 %v252
    %540 = vmatpush1.bf16.msra.mxu0 %v251
    %541 = vmatprep.subr.bf16.mxu0 %v248
    %542 = vmatpush1.bf16.msra.mxu0 %v247
    %543 = vmatprep.subr.bf16.mxu0 %v244
    %544 = vmatpush1.bf16.msra.mxu0 %v243
    %545 = vmatprep.subr.bf16.mxu0 %v240
    %546 = vmatpush1.bf16.msra.mxu0 %v239
    %547 = vmatprep.subr.bf16.mxu0 0
    %548 = vmatpush2.bf16.msra.mxu0 0
    %549 = vmatprep.subr.bf16.mxu0 0
    %550 = vmatpush2.bf16.msra.mxu0 0
    %551 = vmatprep.subr.bf16.mxu0 0
    %552 = vmatpush2.bf16.msra.mxu0 0
    %553 = vmatprep.subr.bf16.mxu0 0
    %554 = vmatpush2.bf16.msra.mxu0 0
    %555 = vmatprep.subr.bf16.mxu0 0
    %556 = vmatpush2.bf16.msra.mxu0 0
    %557 = vmatprep.subr.bf16.mxu0 0
    %558 = vmatpush2.bf16.msra.mxu0 0
    %559 = vmatprep.subr.bf16.mxu0 0
    %560 = vmatpush2.bf16.msra.mxu0 0
    %561 = vmatprep.subr.bf16.mxu0 0
    %562 = vmatpush2.bf16.msra.mxu0 0
    %563 = vmatprep.mubr.bf16.mxu0 0
    %564 = vmatmul.mubr.bf16.gmra.mxu0 %v522
    %v565 = vpop.f32.mrf.mxu0
    %v566 = vadd.f32 %v523, %v565
    %v567 = vpop.f32.mrf.mxu0
    %v568 = vadd.f32 %v524, %v567
    %v569 = vpop.f32.mrf.mxu0
    %v570 = vpop.f32.mrf.mxu0
    %571 = vdwg.mxu0
    %572 = vmatprep.subr.bf16.mxu0 %v270
    %573 = vmatpush1.bf16.msra.mxu0 %v269
    %574 = vmatprep.subr.bf16.mxu0 %v266
    %575 = vmatpush1.bf16.msra.mxu0 %v265
    %576 = vmatprep.subr.bf16.mxu0 %v262
    %577 = vmatpush1.bf16.msra.mxu0 %v261
    %578 = vmatprep.subr.bf16.mxu0 %v258
    %579 = vmatpush1.bf16.msra.mxu0 %v257
    %580 = vmatprep.subr.bf16.mxu0 %v254
    %581 = vmatpush1.bf16.msra.mxu0 %v253
    %582 = vmatprep.subr.bf16.mxu0 %v250
    %583 = vmatpush1.bf16.msra.mxu0 %v249
    %584 = vmatprep.subr.bf16.mxu0 %v246
    %585 = vmatpush1.bf16.msra.mxu0 %v245
    %586 = vmatprep.subr.bf16.mxu0 %v242
    %587 = vmatpush1.bf16.msra.mxu0 %v241
    %588 = vmatprep.subr.bf16.mxu0 0
    %589 = vmatpush2.bf16.msra.mxu0 0
    %590 = vmatprep.subr.bf16.mxu0 0
    %591 = vmatpush2.bf16.msra.mxu0 0
    %592 = vmatprep.subr.bf16.mxu0 0
    %593 = vmatpush2.bf16.msra.mxu0 0
    %594 = vmatprep.subr.bf16.mxu0 0
    %595 = vmatpush2.bf16.msra.mxu0 0
    %596 = vmatprep.subr.bf16.mxu0 0
    %597 = vmatpush2.bf16.msra.mxu0 0
    %598 = vmatprep.subr.bf16.mxu0 0
    %599 = vmatpush2.bf16.msra.mxu0 0
    %600 = vmatprep.subr.bf16.mxu0 0
    %601 = vmatpush2.bf16.msra.mxu0 0
    %602 = vmatprep.subr.bf16.mxu0 0
    %603 = vmatpush2.bf16.msra.mxu0 0
    %604 = vmatprep.mubr.bf16.mxu0 0
    %605 = vmatmul.mubr.bf16.gmra.mxu0 %v522
    %v606 = vpop.f32.mrf.mxu0
    %v607 = vadd.f32 %v525, %v606
    %v608 = vpop.f32.mrf.mxu0
    %v609 = vadd.f32 %v526, %v608
    %v610 = vpop.f32.mrf.mxu0
    %v611 = vpop.f32.mrf.mxu0
    %612 = vdwg.mxu0
    %v613 = vsub.f32 0.0, %v566
    %v614 = vsub.f32 0.0, %v568
    %v615 = vsub.f32 0.0, %v607
    %v616 = vmul.f32 %v613, 1.442695
    %v617 = vpow.pop %v616
    %v618 = vmul.f32 %v614, 1.442695
    %v619 = vpow.pop %v618
    %v620 = vmul.f32 %v615, 1.442695
    %v621 = vpow.pop %v620
    %v622 = vadd.f32 %v617, 1.0
    %v623 = vadd.f32 %v619, 1.0
    %v624 = vadd.f32 %v621, 1.0
    %v625 = vrcp.pop %v622
    %v626 = vrcp.pop %v623
    %v627 = vrcp.pop %v624
    %v628 = vtanh.pop %v609
    %v629 = vmul.f32 %v626, %v519
    %v630 = vmul.f32 %v625, %v628
    %v631 = vadd.f32 %v629, %v630
    %v632 = vtanh.pop %v631
    %v633 = vmul.f32 %v627, %v632
    %v634 = vpack.c.bf16 %v633, %v633
    %v635 = vrot.slane %v107, 3
    %v636 = vrot.slane %v108, 3
    %v637 = vrot.slane %v109, 3
    %v638 = vrot.slane %v110, 3
    %643 = vmatprep.subr.bf16.mxu0 %v268
    %644 = vmatpush1.bf16.msra.mxu0 %v267
    %645 = vmatprep.subr.bf16.mxu0 %v264
    %646 = vmatpush1.bf16.msra.mxu0 %v263
    %647 = vmatprep.subr.bf16.mxu0 %v260
    %648 = vmatpush1.bf16.msra.mxu0 %v259
    %649 = vmatprep.subr.bf16.mxu0 %v256
    %650 = vmatpush1.bf16.msra.mxu0 %v255
    %651 = vmatprep.subr.bf16.mxu0 %v252
    %652 = vmatpush1.bf16.msra.mxu0 %v251
    %653 = vmatprep.subr.bf16.mxu0 %v248
    %654 = vmatpush1.bf16.msra.mxu0 %v247
    %655 = vmatprep.subr.bf16.mxu0 %v244
    %656 = vmatpush1.bf16.msra.mxu0 %v243
    %657 = vmatprep.subr.bf16.mxu0 %v240
    %658 = vmatpush1.bf16.msra.mxu0 %v239
    %659 = vmatprep.subr.bf16.mxu0 0
    %660 = vmatpush2.bf16.msra.mxu0 0
    %661 = vmatprep.subr.bf16.mxu0 0
    %662 = vmatpush2.bf16.msra.mxu0 0
    %663 = vmatprep.subr.bf16.mxu0 0
    %664 = vmatpush2.bf16.msra.mxu0 0
    %665 = vmatprep.subr.bf16.mxu0 0
    %666 = vmatpush2.bf16.msra.mxu0 0
    %667 = vmatprep.subr.bf16.mxu0 0
    %668 = vmatpush2.bf16.msra.mxu0 0
    %669 = vmatprep.subr.bf16.mxu0 0
    %670 = vmatpush2.bf16.msra.mxu0 0
    %671 = vmatprep.subr.bf16.mxu0 0
    %672 = vmatpush2.bf16.msra.mxu0 0
    %673 = vmatprep.subr.bf16.mxu0 0
    %674 = vmatpush2.bf16.msra.mxu0 0
    %675 = vmatprep.mubr.bf16.mxu0 0
    %676 = vmatmul.mubr.bf16.gmra.mxu0 %v634
    %v677 = vpop.f32.mrf.mxu0
    %v678 = vadd.f32 %v635, %v677
    %v679 = vpop.f32.mrf.mxu0
    %v680 = vadd.f32 %v636, %v679
    %v681 = vpop.f32.mrf.mxu0
    %v682 = vpop.f32.mrf.mxu0
    %683 = vdwg.mxu0
    %684 = vmatprep.subr.bf16.mxu0 %v270
    %685 = vmatpush1.bf16.msra.mxu0 %v269
    %686 = vmatprep.subr.bf16.mxu0 %v266
    %687 = vmatpush1.bf16.msra.mxu0 %v265
    %688 = vmatprep.subr.bf16.mxu0 %v262
    %689 = vmatpush1.bf16.msra.mxu0 %v261
    %690 = vmatprep.subr.bf16.mxu0 %v258
    %691 = vmatpush1.bf16.msra.mxu0 %v257
    %692 = vmatprep.subr.bf16.mxu0 %v254
    %693 = vmatpush1.bf16.msra.mxu0 %v253
    %694 = vmatprep.subr.bf16.mxu0 %v250
    %695 = vmatpush1.bf16.msra.mxu0 %v249
    %696 = vmatprep.subr.bf16.mxu0 %v246
    %697 = vmatpush1.bf16.msra.mxu0 %v245
    %698 = vmatprep.subr.bf16.mxu0 %v242
    %699 = vmatpush1.bf16.msra.mxu0 %v241
    %700 = vmatprep.subr.bf16.mxu0 0
    %701 = vmatpush2.bf16.msra.mxu0 0
    %702 = vmatprep.subr.bf16.mxu0 0
    %703 = vmatpush2.bf16.msra.mxu0 0
    %704 = vmatprep.subr.bf16.mxu0 0
    %705 = vmatpush2.bf16.msra.mxu0 0
    %706 = vmatprep.subr.bf16.mxu0 0
    %707 = vmatpush2.bf16.msra.mxu0 0
    %708 = vmatprep.subr.bf16.mxu0 0
    %709 = vmatpush2.bf16.msra.mxu0 0
    %710 = vmatprep.subr.bf16.mxu0 0
    %711 = vmatpush2.bf16.msra.mxu0 0
    %712 = vmatprep.subr.bf16.mxu0 0
    %713 = vmatpush2.bf16.msra.mxu0 0
    %714 = vmatprep.subr.bf16.mxu0 0
    %715 = vmatpush2.bf16.msra.mxu0 0
    %716 = vmatprep.mubr.bf16.mxu0 0
    %717 = vmatmul.mubr.bf16.gmra.mxu0 %v634
    %v718 = vpop.f32.mrf.mxu0
    %v719 = vadd.f32 %v637, %v718
    %v720 = vpop.f32.mrf.mxu0
    %v721 = vadd.f32 %v638, %v720
    %v722 = vpop.f32.mrf.mxu0
    %v723 = vpop.f32.mrf.mxu0
    %724 = vdwg.mxu0
    %v725 = vsub.f32 0.0, %v678
    %v726 = vsub.f32 0.0, %v680
    %v727 = vsub.f32 0.0, %v719
    %v728 = vmul.f32 %v725, 1.442695
    %v729 = vpow.pop %v728
    %v730 = vmul.f32 %v726, 1.442695
    %v731 = vpow.pop %v730
    %v732 = vmul.f32 %v727, 1.442695
    %v733 = vpow.pop %v732
    %v734 = vadd.f32 %v729, 1.0
    %v735 = vadd.f32 %v731, 1.0
    %v736 = vadd.f32 %v733, 1.0
    %v737 = vrcp.pop %v734
    %v738 = vrcp.pop %v735
    %v739 = vrcp.pop %v736
    %v740 = vtanh.pop %v721
    %v741 = vmul.f32 %v738, %v631
    %v742 = vmul.f32 %v737, %v740
    %v743 = vadd.f32 %v741, %v742
    %v744 = vtanh.pop %v743
    %v745 = vmul.f32 %v739, %v744
    %v746 = vpack.c.bf16 %v745, %v745
    %v747 = vrot.slane %v107, 4
    %v748 = vrot.slane %v108, 4
    %v749 = vrot.slane %v109, 4
    %v750 = vrot.slane %v110, 4
    %755 = vmatprep.subr.bf16.mxu0 %v268
    %756 = vmatpush1.bf16.msra.mxu0 %v267
    %757 = vmatprep.subr.bf16.mxu0 %v264
    %758 = vmatpush1.bf16.msra.mxu0 %v263
    %759 = vmatprep.subr.bf16.mxu0 %v260
    %760 = vmatpush1.bf16.msra.mxu0 %v259
    %761 = vmatprep.subr.bf16.mxu0 %v256
    %762 = vmatpush1.bf16.msra.mxu0 %v255
    %763 = vmatprep.subr.bf16.mxu0 %v252
    %764 = vmatpush1.bf16.msra.mxu0 %v251
    %765 = vmatprep.subr.bf16.mxu0 %v248
    %766 = vmatpush1.bf16.msra.mxu0 %v247
    %767 = vmatprep.subr.bf16.mxu0 %v244
    %768 = vmatpush1.bf16.msra.mxu0 %v243
    %769 = vmatprep.subr.bf16.mxu0 %v240
    %770 = vmatpush1.bf16.msra.mxu0 %v239
    %771 = vmatprep.subr.bf16.mxu0 0
    %772 = vmatpush2.bf16.msra.mxu0 0
    %773 = vmatprep.subr.bf16.mxu0 0
    %774 = vmatpush2.bf16.msra.mxu0 0
    %775 = vmatprep.subr.bf16.mxu0 0
    %776 = vmatpush2.bf16.msra.mxu0 0
    %777 = vmatprep.subr.bf16.mxu0 0
    %778 = vmatpush2.bf16.msra.mxu0 0
    %779 = vmatprep.subr.bf16.mxu0 0
    %780 = vmatpush2.bf16.msra.mxu0 0
    %781 = vmatprep.subr.bf16.mxu0 0
    %782 = vmatpush2.bf16.msra.mxu0 0
    %783 = vmatprep.subr.bf16.mxu0 0
    %784 = vmatpush2.bf16.msra.mxu0 0
    %785 = vmatprep.subr.bf16.mxu0 0
    %786 = vmatpush2.bf16.msra.mxu0 0
    %787 = vmatprep.mubr.bf16.mxu0 0
    %788 = vmatmul.mubr.bf16.gmra.mxu0 %v746
    %v789 = vpop.f32.mrf.mxu0
    %v790 = vadd.f32 %v747, %v789
    %v791 = vpop.f32.mrf.mxu0
    %v792 = vadd.f32 %v748, %v791
    %v793 = vpop.f32.mrf.mxu0
    %v794 = vpop.f32.mrf.mxu0
    %795 = vdwg.mxu0
    %796 = vmatprep.subr.bf16.mxu0 %v270
    %797 = vmatpush1.bf16.msra.mxu0 %v269
    %798 = vmatprep.subr.bf16.mxu0 %v266
    %799 = vmatpush1.bf16.msra.mxu0 %v265
    %800 = vmatprep.subr.bf16.mxu0 %v262
    %801 = vmatpush1.bf16.msra.mxu0 %v261
    %802 = vmatprep.subr.bf16.mxu0 %v258
    %803 = vmatpush1.bf16.msra.mxu0 %v257
    %804 = vmatprep.subr.bf16.mxu0 %v254
    %805 = vmatpush1.bf16.msra.mxu0 %v253
    %806 = vmatprep.subr.bf16.mxu0 %v250
    %807 = vmatpush1.bf16.msra.mxu0 %v249
    %808 = vmatprep.subr.bf16.mxu0 %v246
    %809 = vmatpush1.bf16.msra.mxu0 %v245
    %810 = vmatprep.subr.bf16.mxu0 %v242
    %811 = vmatpush1.bf16.msra.mxu0 %v241
    %812 = vmatprep.subr.bf16.mxu0 0
    %813 = vmatpush2.bf16.msra.mxu0 0
    %814 = vmatprep.subr.bf16.mxu0 0
    %815 = vmatpush2.bf16.msra.mxu0 0
    %816 = vmatprep.subr.bf16.mxu0 0
    %817 = vmatpush2.bf16.msra.mxu0 0
    %818 = vmatprep.subr.bf16.mxu0 0
    %819 = vmatpush2.bf16.msra.mxu0 0
    %820 = vmatprep.subr.bf16.mxu0 0
    %821 = vmatpush2.bf16.msra.mxu0 0
    %822 = vmatprep.subr.bf16.mxu0 0
    %823 = vmatpush2.bf16.msra.mxu0 0
    %824 = vmatprep.subr.bf16.mxu0 0
    %825 = vmatpush2.bf16.msra.mxu0 0
    %826 = vmatprep.subr.bf16.mxu0 0
    %827 = vmatpush2.bf16.msra.mxu0 0
    %828 = vmatprep.mubr.bf16.mxu0 0
    %829 = vmatmul.mubr.bf16.gmra.mxu0 %v746
    %v830 = vpop.f32.mrf.mxu0
    %v831 = vadd.f32 %v749, %v830
    %v832 = vpop.f32.mrf.mxu0
    %v833 = vadd.f32 %v750, %v832
    %v834 = vpop.f32.mrf.mxu0
    %v835 = vpop.f32.mrf.mxu0
    %836 = vdwg.mxu0
    %v837 = vsub.f32 0.0, %v790
    %v838 = vsub.f32 0.0, %v792
    %v839 = vsub.f32 0.0, %v831
    %v840 = vmul.f32 %v837, 1.442695
    %v841 = vpow.pop %v840
    %v842 = vmul.f32 %v838, 1.442695
    %v843 = vpow.pop %v842
    %v844 = vmul.f32 %v839, 1.442695
    %v845 = vpow.pop %v844
    %v846 = vadd.f32 %v841, 1.0
    %v847 = vadd.f32 %v843, 1.0
    %v848 = vadd.f32 %v845, 1.0
    %v849 = vrcp.pop %v846
    %v850 = vrcp.pop %v847
    %v851 = vrcp.pop %v848
    %v852 = vtanh.pop %v833
    %v853 = vmul.f32 %v850, %v743
    %v854 = vmul.f32 %v849, %v852
    %v855 = vadd.f32 %v853, %v854
    %v856 = vtanh.pop %v855
    %v857 = vmul.f32 %v851, %v856
    %v858 = vpack.c.bf16 %v857, %v857
    %v859 = vrot.slane %v107, 5
    %v860 = vrot.slane %v108, 5
    %v861 = vrot.slane %v109, 5
    %v862 = vrot.slane %v110, 5
    %867 = vmatprep.subr.bf16.mxu0 %v268
    %868 = vmatpush1.bf16.msra.mxu0 %v267
    %869 = vmatprep.subr.bf16.mxu0 %v264
    %870 = vmatpush1.bf16.msra.mxu0 %v263
    %871 = vmatprep.subr.bf16.mxu0 %v260
    %872 = vmatpush1.bf16.msra.mxu0 %v259
    %873 = vmatprep.subr.bf16.mxu0 %v256
    %874 = vmatpush1.bf16.msra.mxu0 %v255
    %875 = vmatprep.subr.bf16.mxu0 %v252
    %876 = vmatpush1.bf16.msra.mxu0 %v251
    %877 = vmatprep.subr.bf16.mxu0 %v248
    %878 = vmatpush1.bf16.msra.mxu0 %v247
    %879 = vmatprep.subr.bf16.mxu0 %v244
    %880 = vmatpush1.bf16.msra.mxu0 %v243
    %881 = vmatprep.subr.bf16.mxu0 %v240
    %882 = vmatpush1.bf16.msra.mxu0 %v239
    %883 = vmatprep.subr.bf16.mxu0 0
    %884 = vmatpush2.bf16.msra.mxu0 0
    %885 = vmatprep.subr.bf16.mxu0 0
    %886 = vmatpush2.bf16.msra.mxu0 0
    %887 = vmatprep.subr.bf16.mxu0 0
    %888 = vmatpush2.bf16.msra.mxu0 0
    %889 = vmatprep.subr.bf16.mxu0 0
    %890 = vmatpush2.bf16.msra.mxu0 0
    %891 = vmatprep.subr.bf16.mxu0 0
    %892 = vmatpush2.bf16.msra.mxu0 0
    %893 = vmatprep.subr.bf16.mxu0 0
    %894 = vmatpush2.bf16.msra.mxu0 0
    %895 = vmatprep.subr.bf16.mxu0 0
    %896 = vmatpush2.bf16.msra.mxu0 0
    %897 = vmatprep.subr.bf16.mxu0 0
    %898 = vmatpush2.bf16.msra.mxu0 0
    %899 = vmatprep.mubr.bf16.mxu0 0
    %900 = vmatmul.mubr.bf16.gmra.mxu0 %v858
    %v901 = vpop.f32.mrf.mxu0
    %v902 = vadd.f32 %v859, %v901
    %v903 = vpop.f32.mrf.mxu0
    %v904 = vadd.f32 %v860, %v903
    %v905 = vpop.f32.mrf.mxu0
    %v906 = vpop.f32.mrf.mxu0
    %907 = vdwg.mxu0
    %908 = vmatprep.subr.bf16.mxu0 %v270
    %909 = vmatpush1.bf16.msra.mxu0 %v269
    %910 = vmatprep.subr.bf16.mxu0 %v266
    %911 = vmatpush1.bf16.msra.mxu0 %v265
    %912 = vmatprep.subr.bf16.mxu0 %v262
    %913 = vmatpush1.bf16.msra.mxu0 %v261
    %914 = vmatprep.subr.bf16.mxu0 %v258
    %915 = vmatpush1.bf16.msra.mxu0 %v257
    %916 = vmatprep.subr.bf16.mxu0 %v254
    %917 = vmatpush1.bf16.msra.mxu0 %v253
    %918 = vmatprep.subr.bf16.mxu0 %v250
    %919 = vmatpush1.bf16.msra.mxu0 %v249
    %920 = vmatprep.subr.bf16.mxu0 %v246
    %921 = vmatpush1.bf16.msra.mxu0 %v245
    %922 = vmatprep.subr.bf16.mxu0 %v242
    %923 = vmatpush1.bf16.msra.mxu0 %v241
    %924 = vmatprep.subr.bf16.mxu0 0
    %925 = vmatpush2.bf16.msra.mxu0 0
    %926 = vmatprep.subr.bf16.mxu0 0
    %927 = vmatpush2.bf16.msra.mxu0 0
    %928 = vmatprep.subr.bf16.mxu0 0
    %929 = vmatpush2.bf16.msra.mxu0 0
    %930 = vmatprep.subr.bf16.mxu0 0
    %931 = vmatpush2.bf16.msra.mxu0 0
    %932 = vmatprep.subr.bf16.mxu0 0
    %933 = vmatpush2.bf16.msra.mxu0 0
    %934 = vmatprep.subr.bf16.mxu0 0
    %935 = vmatpush2.bf16.msra.mxu0 0
    %936 = vmatprep.subr.bf16.mxu0 0
    %937 = vmatpush2.bf16.msra.mxu0 0
    %938 = vmatprep.subr.bf16.mxu0 0
    %939 = vmatpush2.bf16.msra.mxu0 0
    %940 = vmatprep.mubr.bf16.mxu0 0
    %941 = vmatmul.mubr.bf16.gmra.mxu0 %v858
    %v942 = vpop.f32.mrf.mxu0
    %v943 = vadd.f32 %v861, %v942
    %v944 = vpop.f32.mrf.mxu0
    %v945 = vadd.f32 %v862, %v944
    %v946 = vpop.f32.mrf.mxu0
    %v947 = vpop.f32.mrf.mxu0
    %948 = vdwg.mxu0
    %v949 = vsub.f32 0.0, %v902
    %v950 = vsub.f32 0.0, %v904
    %v951 = vsub.f32 0.0, %v943
    %v952 = vmul.f32 %v949, 1.442695
    %v953 = vpow.pop %v952
    %v954 = vmul.f32 %v950, 1.442695
    %v955 = vpow.pop %v954
    %v956 = vmul.f32 %v951, 1.442695
    %v957 = vpow.pop %v956
    %v958 = vadd.f32 %v953, 1.0
    %v959 = vadd.f32 %v955, 1.0
    %v960 = vadd.f32 %v957, 1.0
    %v961 = vrcp.pop %v958
    %v962 = vrcp.pop %v959
    %v963 = vrcp.pop %v960
    %v964 = vtanh.pop %v945
    %v965 = vmul.f32 %v962, %v855
    %v966 = vmul.f32 %v961, %v964
    %v967 = vadd.f32 %v965, %v966
    %v968 = vtanh.pop %v967
    %v969 = vmul.f32 %v963, %v968
    %v970 = vpack.c.bf16 %v969, %v969
    %v971 = vrot.slane %v107, 6
    %v972 = vrot.slane %v108, 6
    %v973 = vrot.slane %v109, 6
    %v974 = vrot.slane %v110, 6
    %979 = vmatprep.subr.bf16.mxu0 %v268
    %980 = vmatpush1.bf16.msra.mxu0 %v267
    %981 = vmatprep.subr.bf16.mxu0 %v264
    %982 = vmatpush1.bf16.msra.mxu0 %v263
    %983 = vmatprep.subr.bf16.mxu0 %v260
    %984 = vmatpush1.bf16.msra.mxu0 %v259
    %985 = vmatprep.subr.bf16.mxu0 %v256
    %986 = vmatpush1.bf16.msra.mxu0 %v255
    %987 = vmatprep.subr.bf16.mxu0 %v252
    %988 = vmatpush1.bf16.msra.mxu0 %v251
    %989 = vmatprep.subr.bf16.mxu0 %v248
    %990 = vmatpush1.bf16.msra.mxu0 %v247
    %991 = vmatprep.subr.bf16.mxu0 %v244
    %992 = vmatpush1.bf16.msra.mxu0 %v243
    %993 = vmatprep.subr.bf16.mxu0 %v240
    %994 = vmatpush1.bf16.msra.mxu0 %v239
    %995 = vmatprep.subr.bf16.mxu0 0
    %996 = vmatpush2.bf16.msra.mxu0 0
    %997 = vmatprep.subr.bf16.mxu0 0
    %998 = vmatpush2.bf16.msra.mxu0 0
    %999 = vmatprep.subr.bf16.mxu0 0
    %1000 = vmatpush2.bf16.msra.mxu0 0
    %1001 = vmatprep.subr.bf16.mxu0 0
    %1002 = vmatpush2.bf16.msra.mxu0 0
    %1003 = vmatprep.subr.bf16.mxu0 0
    %1004 = vmatpush2.bf16.msra.mxu0 0
    %1005 = vmatprep.subr.bf16.mxu0 0
    %1006 = vmatpush2.bf16.msra.mxu0 0
    %1007 = vmatprep.subr.bf16.mxu0 0
    %1008 = vmatpush2.bf16.msra.mxu0 0
    %1009 = vmatprep.subr.bf16.mxu0 0
    %1010 = vmatpush2.bf16.msra.mxu0 0
    %1011 = vmatprep.mubr.bf16.mxu0 0
    %1012 = vmatmul.mubr.bf16.gmra.mxu0 %v970
    %v1013 = vpop.f32.mrf.mxu0
    %v1014 = vadd.f32 %v971, %v1013
    %v1015 = vpop.f32.mrf.mxu0
    %v1016 = vadd.f32 %v972, %v1015
    %v1017 = vpop.f32.mrf.mxu0
    %v1018 = vpop.f32.mrf.mxu0
    %1019 = vdwg.mxu0
    %1020 = vmatprep.subr.bf16.mxu0 %v270
    %1021 = vmatpush1.bf16.msra.mxu0 %v269
    %1022 = vmatprep.subr.bf16.mxu0 %v266
    %1023 = vmatpush1.bf16.msra.mxu0 %v265
    %1024 = vmatprep.subr.bf16.mxu0 %v262
    %1025 = vmatpush1.bf16.msra.mxu0 %v261
    %1026 = vmatprep.subr.bf16.mxu0 %v258
    %1027 = vmatpush1.bf16.msra.mxu0 %v257
    %1028 = vmatprep.subr.bf16.mxu0 %v254
    %1029 = vmatpush1.bf16.msra.mxu0 %v253
    %1030 = vmatprep.subr.bf16.mxu0 %v250
    %1031 = vmatpush1.bf16.msra.mxu0 %v249
    %1032 = vmatprep.subr.bf16.mxu0 %v246
    %1033 = vmatpush1.bf16.msra.mxu0 %v245
    %1034 = vmatprep.subr.bf16.mxu0 %v242
    %1035 = vmatpush1.bf16.msra.mxu0 %v241
    %1036 = vmatprep.subr.bf16.mxu0 0
    %1037 = vmatpush2.bf16.msra.mxu0 0
    %1038 = vmatprep.subr.bf16.mxu0 0
    %1039 = vmatpush2.bf16.msra.mxu0 0
    %1040 = vmatprep.subr.bf16.mxu0 0
    %1041 = vmatpush2.bf16.msra.mxu0 0
    %1042 = vmatprep.subr.bf16.mxu0 0
    %1043 = vmatpush2.bf16.msra.mxu0 0
    %1044 = vmatprep.subr.bf16.mxu0 0
    %1045 = vmatpush2.bf16.msra.mxu0 0
    %1046 = vmatprep.subr.bf16.mxu0 0
    %1047 = vmatpush2.bf16.msra.mxu0 0
    %1048 = vmatprep.subr.bf16.mxu0 0
    %1049 = vmatpush2.bf16.msra.mxu0 0
    %1050 = vmatprep.subr.bf16.mxu0 0
    %1051 = vmatpush2.bf16.msra.mxu0 0
    %1052 = vmatprep.mubr.bf16.mxu0 0
    %1053 = vmatmul.mubr.bf16.gmra.mxu0 %v970
    %v1054 = vpop.f32.mrf.mxu0
    %v1055 = vadd.f32 %v973, %v1054
    %v1056 = vpop.f32.mrf.mxu0
    %v1057 = vadd.f32 %v974, %v1056
    %v1058 = vpop.f32.mrf.mxu0
    %v1059 = vpop.f32.mrf.mxu0
    %1060 = vdwg.mxu0
    %v1061 = vsub.f32 0.0, %v1014
    %v1062 = vsub.f32 0.0, %v1016
    %v1063 = vsub.f32 0.0, %v1055
    %v1064 = vmul.f32 %v1061, 1.442695
    %v1065 = vpow.pop %v1064
    %v1066 = vmul.f32 %v1062, 1.442695
    %v1067 = vpow.pop %v1066
    %v1068 = vmul.f32 %v1063, 1.442695
    %v1069 = vpow.pop %v1068
    %v1070 = vadd.f32 %v1065, 1.0
    %v1071 = vadd.f32 %v1067, 1.0
    %v1072 = vadd.f32 %v1069, 1.0
    %v1073 = vrcp.pop %v1070
    %v1074 = vrcp.pop %v1071
    %v1075 = vrcp.pop %v1072
    %v1076 = vtanh.pop %v1057
    %v1077 = vmul.f32 %v1074, %v967
    %v1078 = vmul.f32 %v1073, %v1076
    %v1079 = vadd.f32 %v1077, %v1078
    %v1080 = vtanh.pop %v1079
    %v1081 = vmul.f32 %v1075, %v1080
    %v1082 = vpack.c.bf16 %v1081, %v1081
    %v1083 = vrot.slane %v107, 7
    %v1084 = vrot.slane %v108, 7
    %v1085 = vrot.slane %v109, 7
    %v1086 = vrot.slane %v110, 7
    %1091 = vmatprep.subr.bf16.mxu0 %v268
    %1092 = vmatpush1.bf16.msra.mxu0 %v267
    %1093 = vmatprep.subr.bf16.mxu0 %v264
    %1094 = vmatpush1.bf16.msra.mxu0 %v263
    %1095 = vmatprep.subr.bf16.mxu0 %v260
    %1096 = vmatpush1.bf16.msra.mxu0 %v259
    %1097 = vmatprep.subr.bf16.mxu0 %v256
    %1098 = vmatpush1.bf16.msra.mxu0 %v255
    %1099 = vmatprep.subr.bf16.mxu0 %v252
    %1100 = vmatpush1.bf16.msra.mxu0 %v251
    %1101 = vmatprep.subr.bf16.mxu0 %v248
    %1102 = vmatpush1.bf16.msra.mxu0 %v247
    %1103 = vmatprep.subr.bf16.mxu0 %v244
    %1104 = vmatpush1.bf16.msra.mxu0 %v243
    %1105 = vmatprep.subr.bf16.mxu0 %v240
    %1106 = vmatpush1.bf16.msra.mxu0 %v239
    %1107 = vmatprep.subr.bf16.mxu0 0
    %1108 = vmatpush2.bf16.msra.mxu0 0
    %1109 = vmatprep.subr.bf16.mxu0 0
    %1110 = vmatpush2.bf16.msra.mxu0 0
    %1111 = vmatprep.subr.bf16.mxu0 0
    %1112 = vmatpush2.bf16.msra.mxu0 0
    %1113 = vmatprep.subr.bf16.mxu0 0
    %1114 = vmatpush2.bf16.msra.mxu0 0
    %1115 = vmatprep.subr.bf16.mxu0 0
    %1116 = vmatpush2.bf16.msra.mxu0 0
    %1117 = vmatprep.subr.bf16.mxu0 0
    %1118 = vmatpush2.bf16.msra.mxu0 0
    %1119 = vmatprep.subr.bf16.mxu0 0
    %1120 = vmatpush2.bf16.msra.mxu0 0
    %1121 = vmatprep.subr.bf16.mxu0 0
    %1122 = vmatpush2.bf16.msra.mxu0 0
    %1123 = vmatprep.mubr.bf16.mxu0 0
    %1124 = vmatmul.mubr.bf16.gmra.mxu0 %v1082
    %v1125 = vpop.f32.mrf.mxu0
    %v1126 = vadd.f32 %v1083, %v1125
    %v1127 = vpop.f32.mrf.mxu0
    %v1128 = vadd.f32 %v1084, %v1127
    %v1129 = vpop.f32.mrf.mxu0
    %v1130 = vpop.f32.mrf.mxu0
    %1131 = vdwg.mxu0
    %1132 = vmatprep.subr.bf16.mxu0 %v270
    %1133 = vmatpush1.bf16.msra.mxu0 %v269
    %1134 = vmatprep.subr.bf16.mxu0 %v266
    %1135 = vmatpush1.bf16.msra.mxu0 %v265
    %1136 = vmatprep.subr.bf16.mxu0 %v262
    %1137 = vmatpush1.bf16.msra.mxu0 %v261
    %1138 = vmatprep.subr.bf16.mxu0 %v258
    %1139 = vmatpush1.bf16.msra.mxu0 %v257
    %1140 = vmatprep.subr.bf16.mxu0 %v254
    %1141 = vmatpush1.bf16.msra.mxu0 %v253
    %1142 = vmatprep.subr.bf16.mxu0 %v250
    %1143 = vmatpush1.bf16.msra.mxu0 %v249
    %1144 = vmatprep.subr.bf16.mxu0 %v246
    %1145 = vmatpush1.bf16.msra.mxu0 %v245
    %1146 = vmatprep.subr.bf16.mxu0 %v242
    %1147 = vmatpush1.bf16.msra.mxu0 %v241
    %1148 = vmatprep.subr.bf16.mxu0 0
    %1149 = vmatpush2.bf16.msra.mxu0 0
    %1150 = vmatprep.subr.bf16.mxu0 0
    %1151 = vmatpush2.bf16.msra.mxu0 0
    %1152 = vmatprep.subr.bf16.mxu0 0
    %1153 = vmatpush2.bf16.msra.mxu0 0
    %1154 = vmatprep.subr.bf16.mxu0 0
    %1155 = vmatpush2.bf16.msra.mxu0 0
    %1156 = vmatprep.subr.bf16.mxu0 0
    %1157 = vmatpush2.bf16.msra.mxu0 0
    %1158 = vmatprep.subr.bf16.mxu0 0
    %1159 = vmatpush2.bf16.msra.mxu0 0
    %1160 = vmatprep.subr.bf16.mxu0 0
    %1161 = vmatpush2.bf16.msra.mxu0 0
    %1162 = vmatprep.subr.bf16.mxu0 0
    %1163 = vmatpush2.bf16.msra.mxu0 0
    %1164 = vmatprep.mubr.bf16.mxu0 0
    %1165 = vmatmul.mubr.bf16.gmra.mxu0 %v1082
    %v1166 = vpop.f32.mrf.mxu0
    %v1167 = vadd.f32 %v1085, %v1166
    %v1168 = vpop.f32.mrf.mxu0
    %v1169 = vadd.f32 %v1086, %v1168
    %v1170 = vpop.f32.mrf.mxu0
    %v1171 = vpop.f32.mrf.mxu0
    %1172 = vdwg.mxu0
    %v1173 = vsub.f32 0.0, %v1126
    %v1174 = vsub.f32 0.0, %v1128
    %v1175 = vsub.f32 0.0, %v1167
    %v1176 = vmul.f32 %v1173, 1.442695
    %v1177 = vpow.pop %v1176
    %v1178 = vmul.f32 %v1174, 1.442695
    %v1179 = vpow.pop %v1178
    %v1180 = vmul.f32 %v1175, 1.442695
    %v1181 = vpow.pop %v1180
    %v1182 = vadd.f32 %v1177, 1.0
    %v1183 = vadd.f32 %v1179, 1.0
    %v1184 = vadd.f32 %v1181, 1.0
    %v1185 = vrcp.pop %v1182
    %v1186 = vrcp.pop %v1183
    %v1187 = vrcp.pop %v1184
    %v1188 = vtanh.pop %v1169
    %v1189 = vmul.f32 %v1186, %v1079
    %v1190 = vmul.f32 %v1185, %v1188
    %v1191 = vadd.f32 %v1189, %v1190
    %v1192 = vtanh.pop %v1191
    %v1193 = vmul.f32 %v1187, %v1192
    %v1194 = vpack.c.bf16 %v1193, %v1193
    %v1195 = vld [vmem:[#allocation5] sm:$0xf]
    %v1196 = vld [vmem:[#allocation5 + $0x4] sm:$0xf]
    %v1197 = vld [vmem:[#allocation5 + $0x8] sm:$0xf]
    %v1198 = vld [vmem:[#allocation5 + $0xc] sm:$0xf]
    %v1199 = vld [vmem:[#allocation5 + $0x10] sm:$0xf]
    %v1200 = vld [vmem:[#allocation5 + $0x14] sm:$0xf]
    %v1201 = vld [vmem:[#allocation5 + $0x18] sm:$0xf]
    %v1202 = vld [vmem:[#allocation5 + $0x1c] sm:$0xf]
    %v1203 = vld [vmem:[#allocation5 + $0x20] sm:$0xf]
    %v1204 = vld [vmem:[#allocation5 + $0x24] sm:$0xf]
    %v1205 = vld [vmem:[#allocation5 + $0x28] sm:$0xf]
    %v1206 = vld [vmem:[#allocation5 + $0x2c] sm:$0xf]
    %v1207 = vld [vmem:[#allocation5 + $0x30] sm:$0xf]
    %v1208 = vld [vmem:[#allocation5 + $0x34] sm:$0xf]
    %v1209 = vld [vmem:[#allocation5 + $0x38] sm:$0xf]
    %v1210 = vld [vmem:[#allocation5 + $0x3c] sm:$0xf]
    %v1211 = vld [vmem:[%s5] sm:$0x1]
    %v1228 = vunpack.c.l.b16 %v1195
    %v1229 = vunpack.c.l.b16 %v1196
    %v1230 = vunpack.c.l.b16 %v1197
    %v1231 = vunpack.c.l.b16 %v1198
    %v1232 = vunpack.c.l.b16 %v1199
    %v1233 = vunpack.c.l.b16 %v1200
    %v1234 = vunpack.c.l.b16 %v1201
    %v1235 = vunpack.c.l.b16 %v1202
    %v1236 = vunpack.c.l.b16 %v1203
    %v1237 = vunpack.c.l.b16 %v1204
    %v1238 = vunpack.c.l.b16 %v1205
    %v1239 = vunpack.c.l.b16 %v1206
    %v1240 = vunpack.c.l.b16 %v1207
    %v1241 = vunpack.c.l.b16 %v1208
    %v1242 = vunpack.c.l.b16 %v1209
    %v1243 = vunpack.c.l.b16 %v1210
    %v1244 = vpack.c.b16 %v1229, %v1228
    %v1245 = vpack.c.b16 %v1231, %v1230
    %v1246 = vpack.c.b16 %v1233, %v1232
    %v1247 = vpack.c.b16 %v1235, %v1234
    %v1248 = vpack.c.b16 %v1237, %v1236
    %v1249 = vpack.c.b16 %v1239, %v1238
    %v1250 = vpack.c.b16 %v1241, %v1240
    %v1251 = vpack.c.b16 %v1243, %v1242
    %1260 = vmatprep.subr.bf16.mxu0 0
    %1261 = vmatpush1.bf16.msra.mxu0 %v1251
    %1262 = vmatprep.subr.bf16.mxu0 0
    %1263 = vmatpush1.bf16.msra.mxu0 %v1250
    %1264 = vmatprep.subr.bf16.mxu0 0
    %1265 = vmatpush1.bf16.msra.mxu0 %v1249
    %1266 = vmatprep.subr.bf16.mxu0 0
    %1267 = vmatpush1.bf16.msra.mxu0 %v1248
    %1268 = vmatprep.subr.bf16.mxu0 0
    %1269 = vmatpush1.bf16.msra.mxu0 %v1247
    %1270 = vmatprep.subr.bf16.mxu0 0
    %1271 = vmatpush1.bf16.msra.mxu0 %v1246
    %1272 = vmatprep.subr.bf16.mxu0 0
    %1273 = vmatpush1.bf16.msra.mxu0 %v1245
    %1274 = vmatprep.subr.bf16.mxu0 0
    %1275 = vmatpush1.bf16.msra.mxu0 %v1244
    %1276 = vmatprep.subr.bf16.mxu0 0
    %1277 = vmatpush2.bf16.msra.mxu0 0
    %1278 = vmatprep.subr.bf16.mxu0 0
    %1279 = vmatpush2.bf16.msra.mxu0 0
    %1280 = vmatprep.subr.bf16.mxu0 0
    %1281 = vmatpush2.bf16.msra.mxu0 0
    %1282 = vmatprep.subr.bf16.mxu0 0
    %1283 = vmatpush2.bf16.msra.mxu0 0
    %1284 = vmatprep.subr.bf16.mxu0 0
    %1285 = vmatpush2.bf16.msra.mxu0 0
    %1286 = vmatprep.subr.bf16.mxu0 0
    %1287 = vmatpush2.bf16.msra.mxu0 0
    %1288 = vmatprep.subr.bf16.mxu0 0
    %1289 = vmatpush2.bf16.msra.mxu0 0
    %1290 = vmatprep.subr.bf16.mxu0 0
    %1291 = vmatpush2.bf16.msra.mxu0 0
    %1292 = vmatprep.mubr.bf16.mxu0 0
    %1293 = vmatmul.mubr.bf16.gmra.mxu0 %v1194
    %v1294 = vpop.f32.mrf.mxu0
    %v1295 = vadd.f32 %v1211, %v1294
    %v1296 = vpop.f32.mrf.mxu0
    %v1297 = vpop.f32.mrf.mxu0
    %v1298 = vpop.f32.mrf.mxu0
    %1299 = vdwg.mxu0
    %1300 = vst [vmem:[#allocation7] sm:$0x1] %v1295
    // Predicated region
    $region34: #{tpu_custom_call.1} parent=1 // pred_check
      _
    $region35: #{tpu_custom_call.1} parent=1 // pred_check_branch
      %1302 = sbr.rel (0) target = $region37
    $region36: #{tpu_custom_call.1} parent=1 // pred_region
      %s1304 = ssub.s32 16, 16
      %1305 = vsyncadd [#allocation4], %s1304
      %s1307 = sshll.u32 [#allocation7], 4
      %s1308 = int_to_ptr.vmem [resolvable:$true] %s1307
      %1310 = dma.vmem_to_hbm [thread:$0]  %s1308, 16, %s6, [#allocation4]
    $region37: #{tpu_custom_call.1} parent=1 // pred_fallthru
      _
    // Predicated region
    $region38: #{tpu_custom_call.1} parent=1 // pred_check
      _
    $region39: #{tpu_custom_call.1} parent=1 // pred_check_branch
      %1312 = sbr.rel (0) target = $region41
    $region40: #{tpu_custom_call.1} parent=1 // pred_region
      %1313 = dma.done [#allocation4], 16
    $region41: #{tpu_custom_call.1} parent=1 // pred_fallthru
      _
    %1314 = vsyncpa [#allocation3], 1
    %1315 = vsyncpa [#allocation6], 1
    %1316 = vsyncpa [#allocation4], 1

</llo_original>
